<compile_context>
chip_gen: v5e
topology: v5e:2x2
jax: 0.10.0
libtpu: 0.0.40
codegen_flags: <defaults>
</compile_context>

<pallas_src>
import jax
import jax.numpy as jnp
from jax.experimental import pallas as pl
from jax.experimental.pallas import tpu as pltpu

BN_EPS = 1e-5     # nn.BatchNorm1d default eps
COS_EPS = 1e-8    # F.cosine_similarity default eps


# ---------------------------------------------------------------- kernels ----

def _fused_stack_kernel(
        x_ref,
        bb_w, bb_b,
        p1_w, p1_b, p1_g, p1_be,
        p2_w, p2_b, p2_g, p2_be,
        p3_w, p3_b, p3_g, p3_be,
        h1_w, h1_b, h1_g, h1_be,
        h2_w, h2_b,
        z_ref, p_ref):
    """One grid step == one view. Runs backbone->projector->predictor fully
    in VMEM, with per-view BatchNorm batch statistics (training mode)."""

    def lin(x, w, b):
        # bf16 weights, bf16 activations on the MXU, f32 accumulation.
        return (jnp.dot(x.astype(jnp.bfloat16), w[...],
                        preferred_element_type=jnp.float32) + b[...])

    def bn(y, g, be):
        # BatchNorm1d, training mode: biased batch variance, f32 math.
        m = jnp.mean(y, axis=0, keepdims=True)
        v = jnp.mean(jnp.square(y - m), axis=0, keepdims=True)
        return (y - m) * jax.lax.rsqrt(v + BN_EPS) * g[...] + be[...]

    x = x_ref[...]                                                # (B, in_flat)
    x = lin(x, bb_w, bb_b)                                        # backbone
    x = jnp.maximum(bn(lin(x, p1_w, p1_b), p1_g, p1_be), 0.0)     # proj layer1
    x = jnp.maximum(bn(lin(x, p2_w, p2_b), p2_g, p2_be), 0.0)     # proj layer2
    z = bn(lin(x, p3_w, p3_b), p3_g, p3_be)                       # proj layer3
    h = jnp.maximum(bn(lin(z, h1_w, h1_b), h1_g, h1_be), 0.0)     # pred layer1
    p = lin(h, h2_w, h2_b)                                        # pred layer2
    z_ref[...] = z
    p_ref[...] = p


def _simsiam_loss_kernel(z_ref, p_ref, o_ref):
    # L = D(p1, z2)/2 + D(p2, z1)/2,  D(p,z) = -mean(cosine_similarity(p, sg(z)))
    z1 = jax.lax.stop_gradient(z_ref[0])   # .detach() — value-identical in fwd
    z2 = jax.lax.stop_gradient(z_ref[1])
    p1 = p_ref[0]
    p2 = p_ref[1]

    def neg_cos_mean(p, z):
        dot = jnp.sum(p * z, axis=-1, keepdims=True)                       # (B,1)
        pn = jnp.maximum(jnp.sqrt(jnp.sum(p * p, axis=-1, keepdims=True)), COS_EPS)
        zn = jnp.maximum(jnp.sqrt(jnp.sum(z * z, axis=-1, keepdims=True)), COS_EPS)
        return -jnp.mean(dot / (pn * zn))

    loss = 0.5 * neg_cos_mean(p1, z2) + 0.5 * neg_cos_mean(p2, z1)
    o_ref[...] = jnp.reshape(loss, (1, 1))


# ------------------------------------------------------------ call helpers ---

_PARAM_ORDER = [
    "bb_w", "bb_b",
    "p1_w", "p1_b", "p1_g", "p1_be",
    "p2_w", "p2_b", "p2_g", "p2_be",
    "p3_w", "p3_b", "p3_g", "p3_be",
    "h1_w", "h1_b", "h1_g", "h1_be",
    "h2_w", "h2_b",
]


def _const_spec(arr):
    # Full-array block, constant block index -> DMA'd once, VMEM-resident
    # across both view grid steps.
    zeros = (0,) * arr.ndim
    return pl.BlockSpec(arr.shape, lambda v, _z=zeros: _z)


def fused_two_view(params, x_stacked):
    """x_stacked: (2, B, in_flat) f32 -> (z, p), each (2, B, dim) f32."""
    V, B, F_in = x_stacked.shape
    d_conn = params["p3_w"].shape[1]
    d_out = params["h2_w"].shape[1]
    weights = [params[n] for n in _PARAM_ORDER]

    in_specs = ([pl.BlockSpec((None, B, F_in), lambda v: (v, 0, 0))]
                + [_const_spec(w) for w in weights])
    out_specs = (pl.BlockSpec((None, B, d_conn), lambda v: (v, 0, 0)),
                 pl.BlockSpec((None, B, d_out), lambda v: (v, 0, 0)))
    out_shape = (jax.ShapeDtypeStruct((V, B, d_conn), jnp.float32),
                 jax.ShapeDtypeStruct((V, B, d_out), jnp.float32))

    z, p = pl.pallas_call(
        _fused_stack_kernel,
        grid=(V,),
        in_specs=in_specs,
        out_specs=out_specs,
        out_shape=out_shape,
        compiler_params=pltpu.CompilerParams(
            dimension_semantics=("parallel",)),   # v7x: one view per TensorCore
    )(x_stacked, *weights)
    return z, p


def simsiam_loss(z, p):
    return pl.pallas_call(
        _simsiam_loss_kernel,
        grid=(1,),
        in_specs=[pl.BlockSpec(z.shape, lambda i: (0, 0, 0)),
                  pl.BlockSpec(p.shape, lambda i: (0, 0, 0))],
        out_specs=pl.BlockSpec((1, 1), lambda i: (0, 0)),
        out_shape=jax.ShapeDtypeStruct((1, 1), jnp.float32),
    )(z, p)[0, 0]


# -------------------------------------------------------------- parameters ---

def make_params(key, in_flat, backbone_dim, proj_hidden, connection_dim,
                pred_hidden, final_out_dim):
    # Projection MLP layer3 applies BatchNorm1d(hidden_dim) after
    # Linear(hidden, out), which (with the PyTorch module defaults) requires
    # out_dim == hidden_dim.
    assert connection_dim == proj_hidden
    assert final_out_dim == connection_dim  # cosine similarity needs matching dims

    def lin(key, fan_in, fan_out):
        kw, kb = jax.random.split(key)
        scale = 1.0 / jnp.sqrt(fan_in)
        w = jax.random.uniform(kw, (fan_in, fan_out), jnp.float32, -scale, scale)
        b = jax.random.uniform(kb, (1, fan_out), jnp.float32, -scale, scale)
        return w.astype(jnp.bfloat16), b     # bf16 weight storage, f32 bias

    def bn(fan_out):
        return (jnp.ones((1, fan_out), jnp.float32),
                jnp.zeros((1, fan_out), jnp.float32))

    keys = jax.random.split(key, 6)
    p = {}
    p["bb_w"], p["bb_b"] = lin(keys[0], in_flat, backbone_dim)          # backbone
    p["p1_w"], p["p1_b"] = lin(keys[1], backbone_dim, proj_hidden)      # proj layer1
    p["p1_g"], p["p1_be"] = bn(proj_hidden)
    p["p2_w"], p["p2_b"] = lin(keys[2], proj_hidden, proj_hidden)       # proj layer2
    p["p2_g"], p["p2_be"] = bn(proj_hidden)
    p["p3_w"], p["p3_b"] = lin(keys[3], proj_hidden, connection_dim)    # proj layer3
    p["p3_g"], p["p3_be"] = bn(connection_dim)
    p["h1_w"], p["h1_b"] = lin(keys[4], connection_dim, pred_hidden)    # pred layer1
    p["h1_g"], p["h1_be"] = bn(pred_hidden)
    p["h2_w"], p["h2_b"] = lin(keys[5], pred_hidden, final_out_dim)     # pred layer2
    return p


# ------------------------------------------------------------- forward pass --

def simsiam_forward(params, x1, x2):
    B = x1.shape[0]
    # flatten both views (glue, plain JAX) and stack on a leading view axis
    x = jnp.stack([x1.reshape(B, -1), x2.reshape(B, -1)], axis=0)   # (2, B, F)
    z, p = fused_two_view(params, x)     # z/p: (2, B, dim), per-view BN stats
    return simsiam_loss(z, p)            # 0.5*D(p1, z2) + 0.5*D(p2, z1)


# ---------------------------------------------------------------- reference --

def _ref_forward(params, x1, x2):
    def lin(x, w, b):
        return jnp.dot(x.astype(jnp.bfloat16), w,
                       preferred_element_type=jnp.float32) + b

    def bn(y, g, be):
        m = jnp.mean(y, axis=0, keepdims=True)
        v = jnp.mean(jnp.square(y - m), axis=0, keepdims=True)
        return (y - m) * jax.lax.rsqrt(v + BN_EPS) * g + be

    def enc(x):
        x = x.reshape(x.shape[0], -1)
        x = lin(x, params["bb_w"], params["bb_b"])
        x = jnp.maximum(bn(lin(x, params["p1_w"], params["p1_b"]),
                           params["p1_g"], params["p1_be"]), 0.0)
        x = jnp.maximum(bn(lin(x, params["p2_w"], params["p2_b"]),
                           params["p2_g"], params["p2_be"]), 0.0)
        x = bn(lin(x, params["p3_w"], params["p3_b"]),
               params["p3_g"], params["p3_be"])
        return x

    def pred(z):
        x = jnp.maximum(bn(lin(z, params["h1_w"], params["h1_b"]),
                           params["h1_g"], params["h1_be"]), 0.0)
        return lin(x, params["h2_w"], params["h2_b"])

    def D(p, z):
        dot = jnp.sum(p * z, axis=-1)
        pn = jnp.maximum(jnp.linalg.norm(p, axis=-1), COS_EPS)
        zn = jnp.maximum(jnp.linalg.norm(z, axis=-1), COS_EPS)
        return -jnp.mean(dot / (pn * zn))

    z1, z2 = enc(x1), enc(x2)
    p1, p2 = pred(z1), pred(z2)
    return 0.5 * D(p1, z2) + 0.5 * D(p2, z1)


# --------------------------------------------------------------------- main --

if __name__ == "__main__":
    B, C, H, W = 8, 4, 8, 8          # small image-like inputs, NCHW
    IN_FLAT = C * H * W              # 256
    BACKBONE_DIM = 128               # backbone.output_dim (scaled down from 2048)
    PROJ_HIDDEN = 256                # projection_MLP hidden (scaled from 2048)
    CONNECTION_DIM = 256             # == PROJ_HIDDEN (required by layer3's BN)
    PRED_HIDDEN = 128                # prediction_MLP hidden (scaled from 512)
    FINAL_OUT_DIM = 256              # == CONNECTION_DIM

    key = jax.random.PRNGKey(0)
    kx1, kx2, kp = jax.random.split(key, 3)
    x1 = jax.random.normal(kx1, (B, C, H, W), jnp.float32)
    x2 = jax.random.normal(kx2, (B, C, H, W), jnp.float32)
    params = make_params(kp, IN_FLAT, BACKBONE_DIM, PROJ_HIDDEN,
                         CONNECTION_DIM, PRED_HIDDEN, FINAL_OUT_DIM)

    loss = jax.jit(simsiam_forward)(params, x1, x2)
    loss = jax.block_until_ready(loss)

    ref = jax.block_until_ready(_ref_forward(params, x1, x2))
    assert jnp.allclose(loss, ref, atol=5e-3), (loss, ref)

    print("KERNEL_OK")
</pallas_src>

<mosaic_0001>
module attributes {stable_mosaic.version = 11 : i64} {
  func.func @_fused_stack_kernel(%arg0: i32, %arg1: memref<1x8x256xf32, #tpu.memory_space<vmem>>, %arg2: memref<256x128xbf16, #tpu.memory_space<vmem>>, %arg3: memref<1x128xf32, #tpu.memory_space<vmem>>, %arg4: memref<128x256xbf16, #tpu.memory_space<vmem>>, %arg5: memref<1x256xf32, #tpu.memory_space<vmem>>, %arg6: memref<1x256xf32, #tpu.memory_space<vmem>>, %arg7: memref<1x256xf32, #tpu.memory_space<vmem>>, %arg8: memref<256x256xbf16, #tpu.memory_space<vmem>>, %arg9: memref<1x256xf32, #tpu.memory_space<vmem>>, %arg10: memref<1x256xf32, #tpu.memory_space<vmem>>, %arg11: memref<1x256xf32, #tpu.memory_space<vmem>>, %arg12: memref<256x256xbf16, #tpu.memory_space<vmem>>, %arg13: memref<1x256xf32, #tpu.memory_space<vmem>>, %arg14: memref<1x256xf32, #tpu.memory_space<vmem>>, %arg15: memref<1x256xf32, #tpu.memory_space<vmem>>, %arg16: memref<256x128xbf16, #tpu.memory_space<vmem>>, %arg17: memref<1x128xf32, #tpu.memory_space<vmem>>, %arg18: memref<1x128xf32, #tpu.memory_space<vmem>>, %arg19: memref<1x128xf32, #tpu.memory_space<vmem>>, %arg20: memref<128x256xbf16, #tpu.memory_space<vmem>>, %arg21: memref<1x256xf32, #tpu.memory_space<vmem>>, %arg22: memref<1x8x256xf32, #tpu.memory_space<vmem>>, %arg23: memref<1x8x256xf32, #tpu.memory_space<vmem>>) attributes {dimension_semantics = [#tpu.dimension_semantics<parallel>], iteration_bounds = array<i64: 2>, scalar_prefetch = 0 : i64, scratch_operands = 0 : i64, tpu.core_type = #tpu.core_type<tc>, window_params = [{transform_indices = @transform_0, window_bounds = array<i64: 1, 8, 256>}, {pipeline_mode = #tpu.pipeline_mode<synchronous>, transform_indices = @transform_1, window_bounds = array<i64: 256, 128>}, {pipeline_mode = #tpu.pipeline_mode<synchronous>, transform_indices = @transform_2, window_bounds = array<i64: 1, 128>}, {pipeline_mode = #tpu.pipeline_mode<synchronous>, transform_indices = @transform_3, window_bounds = array<i64: 128, 256>}, {pipeline_mode = #tpu.pipeline_mode<synchronous>, transform_indices = @transform_4, window_bounds = array<i64: 1, 256>}, {pipeline_mode = #tpu.pipeline_mode<synchronous>, transform_indices = @transform_5, window_bounds = array<i64: 1, 256>}, {pipeline_mode = #tpu.pipeline_mode<synchronous>, transform_indices = @transform_6, window_bounds = array<i64: 1, 256>}, {pipeline_mode = #tpu.pipeline_mode<synchronous>, transform_indices = @transform_7, window_bounds = array<i64: 256, 256>}, {pipeline_mode = #tpu.pipeline_mode<synchronous>, transform_indices = @transform_8, window_bounds = array<i64: 1, 256>}, {pipeline_mode = #tpu.pipeline_mode<synchronous>, transform_indices = @transform_9, window_bounds = array<i64: 1, 256>}, {pipeline_mode = #tpu.pipeline_mode<synchronous>, transform_indices = @transform_10, window_bounds = array<i64: 1, 256>}, {pipeline_mode = #tpu.pipeline_mode<synchronous>, transform_indices = @transform_11, window_bounds = array<i64: 256, 256>}, {pipeline_mode = #tpu.pipeline_mode<synchronous>, transform_indices = @transform_12, window_bounds = array<i64: 1, 256>}, {pipeline_mode = #tpu.pipeline_mode<synchronous>, transform_indices = @transform_13, window_bounds = array<i64: 1, 256>}, {pipeline_mode = #tpu.pipeline_mode<synchronous>, transform_indices = @transform_14, window_bounds = array<i64: 1, 256>}, {pipeline_mode = #tpu.pipeline_mode<synchronous>, transform_indices = @transform_15, window_bounds = array<i64: 256, 128>}, {pipeline_mode = #tpu.pipeline_mode<synchronous>, transform_indices = @transform_16, window_bounds = array<i64: 1, 128>}, {pipeline_mode = #tpu.pipeline_mode<synchronous>, transform_indices = @transform_17, window_bounds = array<i64: 1, 128>}, {pipeline_mode = #tpu.pipeline_mode<synchronous>, transform_indices = @transform_18, window_bounds = array<i64: 1, 128>}, {pipeline_mode = #tpu.pipeline_mode<synchronous>, transform_indices = @transform_19, window_bounds = array<i64: 128, 256>}, {pipeline_mode = #tpu.pipeline_mode<synchronous>, transform_indices = @transform_20, window_bounds = array<i64: 1, 256>}, {transform_indices = @transform_21, window_bounds = array<i64: 1, 8, 256>}, {transform_indices = @transform_22, window_bounds = array<i64: 1, 8, 256>}]} {
    %c0 = arith.constant 0 : index
    %c0_0 = arith.constant 0 : index
    %c0_1 = arith.constant 0 : index
    %0 = vector.load %arg1[%c0, %c0_0, %c0_1] : memref<1x8x256xf32, #tpu.memory_space<vmem>>, vector<1x8x256xf32>
    %1 = vector.shape_cast %0 : vector<1x8x256xf32> to vector<8x256xf32>
    %2 = arith.truncf %1 : vector<8x256xf32> to vector<8x256xbf16>
    %c0_2 = arith.constant 0 : index
    %c0_3 = arith.constant 0 : index
    %3 = vector.load %arg2[%c0_2, %c0_3] : memref<256x128xbf16, #tpu.memory_space<vmem>>, vector<256x128xbf16>
    %cst = arith.constant dense<0.000000e+00> : vector<8x128xf32>
    %4 = tpu.matmul %2, %3, %cst {dimension_numbers = #tpu.dot_dimension_numbers<[1], [0], [0], [1], [0, 0, 1, 1], [], []>} : vector<8x256xbf16>, vector<256x128xbf16>, vector<8x128xf32> -> vector<8x128xf32>
    %c0_4 = arith.constant 0 : index
    %c0_5 = arith.constant 0 : index
    %5 = vector.load %arg3[%c0_4, %c0_5] : memref<1x128xf32, #tpu.memory_space<vmem>>, vector<1x128xf32>
    %6 = vector.broadcast %5 : vector<1x128xf32> to vector<8x128xf32>
    %7 = arith.addf %4, %6 : vector<8x128xf32>
    %8 = arith.truncf %7 : vector<8x128xf32> to vector<8x128xbf16>
    %c0_6 = arith.constant 0 : index
    %c0_7 = arith.constant 0 : index
    %9 = vector.load %arg4[%c0_6, %c0_7] : memref<128x256xbf16, #tpu.memory_space<vmem>>, vector<128x256xbf16>
    %cst_8 = arith.constant dense<0.000000e+00> : vector<8x256xf32>
    %10 = tpu.matmul %8, %9, %cst_8 {dimension_numbers = #tpu.dot_dimension_numbers<[1], [0], [0], [1], [0, 0, 1, 1], [], []>} : vector<8x128xbf16>, vector<128x256xbf16>, vector<8x256xf32> -> vector<8x256xf32>
    %c0_9 = arith.constant 0 : index
    %c0_10 = arith.constant 0 : index
    %11 = vector.load %arg5[%c0_9, %c0_10] : memref<1x256xf32, #tpu.memory_space<vmem>>, vector<1x256xf32>
    %12 = vector.broadcast %11 : vector<1x256xf32> to vector<8x256xf32>
    %13 = arith.addf %10, %12 : vector<8x256xf32>
    %cst_11 = arith.constant dense<0.000000e+00> : vector<256xf32>
    %14 = vector.multi_reduction <add>, %13, %cst_11 [0] : vector<8x256xf32> to vector<256xf32>
    %15 = vector.shape_cast %14 : vector<256xf32> to vector<1x256xf32>
    %cst_12 = arith.constant 8.000000e+00 : f32
    %16 = vector.broadcast %cst_12 : f32 to vector<1x256xf32>
    %17 = arith.divf %15, %16 : vector<1x256xf32>
    %18 = vector.broadcast %17 : vector<1x256xf32> to vector<8x256xf32>
    %19 = arith.subf %13, %18 : vector<8x256xf32>
    %20 = arith.mulf %19, %19 : vector<8x256xf32>
    %cst_13 = arith.constant dense<0.000000e+00> : vector<256xf32>
    %21 = vector.multi_reduction <add>, %20, %cst_13 [0] : vector<8x256xf32> to vector<256xf32>
    %22 = vector.shape_cast %21 : vector<256xf32> to vector<1x256xf32>
    %cst_14 = arith.constant 8.000000e+00 : f32
    %23 = vector.broadcast %cst_14 : f32 to vector<1x256xf32>
    %24 = arith.divf %22, %23 : vector<1x256xf32>
    %25 = vector.broadcast %17 : vector<1x256xf32> to vector<8x256xf32>
    %26 = arith.subf %13, %25 : vector<8x256xf32>
    %cst_15 = arith.constant 9.99999974E-6 : f32
    %27 = vector.broadcast %cst_15 : f32 to vector<1x256xf32>
    %28 = arith.addf %24, %27 : vector<1x256xf32>
    %29 = math.rsqrt %28 : vector<1x256xf32>
    %30 = vector.broadcast %29 : vector<1x256xf32> to vector<8x256xf32>
    %31 = arith.mulf %26, %30 : vector<8x256xf32>
    %c0_16 = arith.constant 0 : index
    %c0_17 = arith.constant 0 : index
    %32 = vector.load %arg6[%c0_16, %c0_17] : memref<1x256xf32, #tpu.memory_space<vmem>>, vector<1x256xf32>
    %33 = vector.broadcast %32 : vector<1x256xf32> to vector<8x256xf32>
    %34 = arith.mulf %31, %33 : vector<8x256xf32>
    %c0_18 = arith.constant 0 : index
    %c0_19 = arith.constant 0 : index
    %35 = vector.load %arg7[%c0_18, %c0_19] : memref<1x256xf32, #tpu.memory_space<vmem>>, vector<1x256xf32>
    %36 = vector.broadcast %35 : vector<1x256xf32> to vector<8x256xf32>
    %37 = arith.addf %34, %36 : vector<8x256xf32>
    %cst_20 = arith.constant 0.000000e+00 : f32
    %38 = vector.broadcast %cst_20 : f32 to vector<8x256xf32>
    %39 = arith.maximumf %37, %38 : vector<8x256xf32>
    %40 = arith.truncf %39 : vector<8x256xf32> to vector<8x256xbf16>
    %c0_21 = arith.constant 0 : index
    %c0_22 = arith.constant 0 : index
    %41 = vector.load %arg8[%c0_21, %c0_22] : memref<256x256xbf16, #tpu.memory_space<vmem>>, vector<256x256xbf16>
    %cst_23 = arith.constant dense<0.000000e+00> : vector<8x256xf32>
    %42 = tpu.matmul %40, %41, %cst_23 {dimension_numbers = #tpu.dot_dimension_numbers<[1], [0], [0], [1], [0, 0, 1, 1], [], []>} : vector<8x256xbf16>, vector<256x256xbf16>, vector<8x256xf32> -> vector<8x256xf32>
    %c0_24 = arith.constant 0 : index
    %c0_25 = arith.constant 0 : index
    %43 = vector.load %arg9[%c0_24, %c0_25] : memref<1x256xf32, #tpu.memory_space<vmem>>, vector<1x256xf32>
    %44 = vector.broadcast %43 : vector<1x256xf32> to vector<8x256xf32>
    %45 = arith.addf %42, %44 : vector<8x256xf32>
    %cst_26 = arith.constant dense<0.000000e+00> : vector<256xf32>
    %46 = vector.multi_reduction <add>, %45, %cst_26 [0] : vector<8x256xf32> to vector<256xf32>
    %47 = vector.shape_cast %46 : vector<256xf32> to vector<1x256xf32>
    %cst_27 = arith.constant 8.000000e+00 : f32
    %48 = vector.broadcast %cst_27 : f32 to vector<1x256xf32>
    %49 = arith.divf %47, %48 : vector<1x256xf32>
    %50 = vector.broadcast %49 : vector<1x256xf32> to vector<8x256xf32>
    %51 = arith.subf %45, %50 : vector<8x256xf32>
    %52 = arith.mulf %51, %51 : vector<8x256xf32>
    %cst_28 = arith.constant dense<0.000000e+00> : vector<256xf32>
    %53 = vector.multi_reduction <add>, %52, %cst_28 [0] : vector<8x256xf32> to vector<256xf32>
    %54 = vector.shape_cast %53 : vector<256xf32> to vector<1x256xf32>
    %cst_29 = arith.constant 8.000000e+00 : f32
    %55 = vector.broadcast %cst_29 : f32 to vector<1x256xf32>
    %56 = arith.divf %54, %55 : vector<1x256xf32>
    %57 = vector.broadcast %49 : vector<1x256xf32> to vector<8x256xf32>
    %58 = arith.subf %45, %57 : vector<8x256xf32>
    %cst_30 = arith.constant 9.99999974E-6 : f32
    %59 = vector.broadcast %cst_30 : f32 to vector<1x256xf32>
    %60 = arith.addf %56, %59 : vector<1x256xf32>
    %61 = math.rsqrt %60 : vector<1x256xf32>
    %62 = vector.broadcast %61 : vector<1x256xf32> to vector<8x256xf32>
    %63 = arith.mulf %58, %62 : vector<8x256xf32>
    %c0_31 = arith.constant 0 : index
    %c0_32 = arith.constant 0 : index
    %64 = vector.load %arg10[%c0_31, %c0_32] : memref<1x256xf32, #tpu.memory_space<vmem>>, vector<1x256xf32>
    %65 = vector.broadcast %64 : vector<1x256xf32> to vector<8x256xf32>
    %66 = arith.mulf %63, %65 : vector<8x256xf32>
    %c0_33 = arith.constant 0 : index
    %c0_34 = arith.constant 0 : index
    %67 = vector.load %arg11[%c0_33, %c0_34] : memref<1x256xf32, #tpu.memory_space<vmem>>, vector<1x256xf32>
    %68 = vector.broadcast %67 : vector<1x256xf32> to vector<8x256xf32>
    %69 = arith.addf %66, %68 : vector<8x256xf32>
    %cst_35 = arith.constant 0.000000e+00 : f32
    %70 = vector.broadcast %cst_35 : f32 to vector<8x256xf32>
    %71 = arith.maximumf %69, %70 : vector<8x256xf32>
    %72 = arith.truncf %71 : vector<8x256xf32> to vector<8x256xbf16>
    %c0_36 = arith.constant 0 : index
    %c0_37 = arith.constant 0 : index
    %73 = vector.load %arg12[%c0_36, %c0_37] : memref<256x256xbf16, #tpu.memory_space<vmem>>, vector<256x256xbf16>
    %cst_38 = arith.constant dense<0.000000e+00> : vector<8x256xf32>
    %74 = tpu.matmul %72, %73, %cst_38 {dimension_numbers = #tpu.dot_dimension_numbers<[1], [0], [0], [1], [0, 0, 1, 1], [], []>} : vector<8x256xbf16>, vector<256x256xbf16>, vector<8x256xf32> -> vector<8x256xf32>
    %c0_39 = arith.constant 0 : index
    %c0_40 = arith.constant 0 : index
    %75 = vector.load %arg13[%c0_39, %c0_40] : memref<1x256xf32, #tpu.memory_space<vmem>>, vector<1x256xf32>
    %76 = vector.broadcast %75 : vector<1x256xf32> to vector<8x256xf32>
    %77 = arith.addf %74, %76 : vector<8x256xf32>
    %cst_41 = arith.constant dense<0.000000e+00> : vector<256xf32>
    %78 = vector.multi_reduction <add>, %77, %cst_41 [0] : vector<8x256xf32> to vector<256xf32>
    %79 = vector.shape_cast %78 : vector<256xf32> to vector<1x256xf32>
    %cst_42 = arith.constant 8.000000e+00 : f32
    %80 = vector.broadcast %cst_42 : f32 to vector<1x256xf32>
    %81 = arith.divf %79, %80 : vector<1x256xf32>
    %82 = vector.broadcast %81 : vector<1x256xf32> to vector<8x256xf32>
    %83 = arith.subf %77, %82 : vector<8x256xf32>
    %84 = arith.mulf %83, %83 : vector<8x256xf32>
    %cst_43 = arith.constant dense<0.000000e+00> : vector<256xf32>
    %85 = vector.multi_reduction <add>, %84, %cst_43 [0] : vector<8x256xf32> to vector<256xf32>
    %86 = vector.shape_cast %85 : vector<256xf32> to vector<1x256xf32>
    %cst_44 = arith.constant 8.000000e+00 : f32
    %87 = vector.broadcast %cst_44 : f32 to vector<1x256xf32>
    %88 = arith.divf %86, %87 : vector<1x256xf32>
    %89 = vector.broadcast %81 : vector<1x256xf32> to vector<8x256xf32>
    %90 = arith.subf %77, %89 : vector<8x256xf32>
    %cst_45 = arith.constant 9.99999974E-6 : f32
    %91 = vector.broadcast %cst_45 : f32 to vector<1x256xf32>
    %92 = arith.addf %88, %91 : vector<1x256xf32>
    %93 = math.rsqrt %92 : vector<1x256xf32>
    %94 = vector.broadcast %93 : vector<1x256xf32> to vector<8x256xf32>
    %95 = arith.mulf %90, %94 : vector<8x256xf32>
    %c0_46 = arith.constant 0 : index
    %c0_47 = arith.constant 0 : index
    %96 = vector.load %arg14[%c0_46, %c0_47] : memref<1x256xf32, #tpu.memory_space<vmem>>, vector<1x256xf32>
    %97 = vector.broadcast %96 : vector<1x256xf32> to vector<8x256xf32>
    %98 = arith.mulf %95, %97 : vector<8x256xf32>
    %c0_48 = arith.constant 0 : index
    %c0_49 = arith.constant 0 : index
    %99 = vector.load %arg15[%c0_48, %c0_49] : memref<1x256xf32, #tpu.memory_space<vmem>>, vector<1x256xf32>
    %100 = vector.broadcast %99 : vector<1x256xf32> to vector<8x256xf32>
    %101 = arith.addf %98, %100 : vector<8x256xf32>
    %102 = arith.truncf %101 : vector<8x256xf32> to vector<8x256xbf16>
    %c0_50 = arith.constant 0 : index
    %c0_51 = arith.constant 0 : index
    %103 = vector.load %arg16[%c0_50, %c0_51] : memref<256x128xbf16, #tpu.memory_space<vmem>>, vector<256x128xbf16>
    %cst_52 = arith.constant dense<0.000000e+00> : vector<8x128xf32>
    %104 = tpu.matmul %102, %103, %cst_52 {dimension_numbers = #tpu.dot_dimension_numbers<[1], [0], [0], [1], [0, 0, 1, 1], [], []>} : vector<8x256xbf16>, vector<256x128xbf16>, vector<8x128xf32> -> vector<8x128xf32>
    %c0_53 = arith.constant 0 : index
    %c0_54 = arith.constant 0 : index
    %105 = vector.load %arg17[%c0_53, %c0_54] : memref<1x128xf32, #tpu.memory_space<vmem>>, vector<1x128xf32>
    %106 = vector.broadcast %105 : vector<1x128xf32> to vector<8x128xf32>
    %107 = arith.addf %104, %106 : vector<8x128xf32>
    %cst_55 = arith.constant dense<0.000000e+00> : vector<128xf32>
    %108 = vector.multi_reduction <add>, %107, %cst_55 [0] : vector<8x128xf32> to vector<128xf32>
    %109 = vector.shape_cast %108 : vector<128xf32> to vector<1x128xf32>
    %cst_56 = arith.constant 8.000000e+00 : f32
    %110 = vector.broadcast %cst_56 : f32 to vector<1x128xf32>
    %111 = arith.divf %109, %110 : vector<1x128xf32>
    %112 = vector.broadcast %111 : vector<1x128xf32> to vector<8x128xf32>
    %113 = arith.subf %107, %112 : vector<8x128xf32>
    %114 = arith.mulf %113, %113 : vector<8x128xf32>
    %cst_57 = arith.constant dense<0.000000e+00> : vector<128xf32>
    %115 = vector.multi_reduction <add>, %114, %cst_57 [0] : vector<8x128xf32> to vector<128xf32>
    %116 = vector.shape_cast %115 : vector<128xf32> to vector<1x128xf32>
    %cst_58 = arith.constant 8.000000e+00 : f32
    %117 = vector.broadcast %cst_58 : f32 to vector<1x128xf32>
    %118 = arith.divf %116, %117 : vector<1x128xf32>
    %119 = vector.broadcast %111 : vector<1x128xf32> to vector<8x128xf32>
    %120 = arith.subf %107, %119 : vector<8x128xf32>
    %cst_59 = arith.constant 9.99999974E-6 : f32
    %121 = vector.broadcast %cst_59 : f32 to vector<1x128xf32>
    %122 = arith.addf %118, %121 : vector<1x128xf32>
    %123 = math.rsqrt %122 : vector<1x128xf32>
    %124 = vector.broadcast %123 : vector<1x128xf32> to vector<8x128xf32>
    %125 = arith.mulf %120, %124 : vector<8x128xf32>
    %c0_60 = arith.constant 0 : index
    %c0_61 = arith.constant 0 : index
    %126 = vector.load %arg18[%c0_60, %c0_61] : memref<1x128xf32, #tpu.memory_space<vmem>>, vector<1x128xf32>
    %127 = vector.broadcast %126 : vector<1x128xf32> to vector<8x128xf32>
    %128 = arith.mulf %125, %127 : vector<8x128xf32>
    %c0_62 = arith.constant 0 : index
    %c0_63 = arith.constant 0 : index
    %129 = vector.load %arg19[%c0_62, %c0_63] : memref<1x128xf32, #tpu.memory_space<vmem>>, vector<1x128xf32>
    %130 = vector.broadcast %129 : vector<1x128xf32> to vector<8x128xf32>
    %131 = arith.addf %128, %130 : vector<8x128xf32>
    %cst_64 = arith.constant 0.000000e+00 : f32
    %132 = vector.broadcast %cst_64 : f32 to vector<8x128xf32>
    %133 = arith.maximumf %131, %132 : vector<8x128xf32>
    %134 = arith.truncf %133 : vector<8x128xf32> to vector<8x128xbf16>
    %c0_65 = arith.constant 0 : index
    %c0_66 = arith.constant 0 : index
    %135 = vector.load %arg20[%c0_65, %c0_66] : memref<128x256xbf16, #tpu.memory_space<vmem>>, vector<128x256xbf16>
    %cst_67 = arith.constant dense<0.000000e+00> : vector<8x256xf32>
    %136 = tpu.matmul %134, %135, %cst_67 {dimension_numbers = #tpu.dot_dimension_numbers<[1], [0], [0], [1], [0, 0, 1, 1], [], []>} : vector<8x128xbf16>, vector<128x256xbf16>, vector<8x256xf32> -> vector<8x256xf32>
    %c0_68 = arith.constant 0 : index
    %c0_69 = arith.constant 0 : index
    %137 = vector.load %arg21[%c0_68, %c0_69] : memref<1x256xf32, #tpu.memory_space<vmem>>, vector<1x256xf32>
    %138 = vector.broadcast %137 : vector<1x256xf32> to vector<8x256xf32>
    %139 = arith.addf %136, %138 : vector<8x256xf32>
    %c0_70 = arith.constant 0 : index
    %c0_71 = arith.constant 0 : index
    %c0_72 = arith.constant 0 : index
    %140 = vector.load %arg22[%c0_70, %c0_71, %c0_72] : memref<1x8x256xf32, #tpu.memory_space<vmem>>, vector<1x8x256xf32>
    %141 = vector.shape_cast %140 : vector<1x8x256xf32> to vector<8x256xf32>
    %142 = vector.shape_cast %101 : vector<8x256xf32> to vector<1x8x256xf32>
    tpu.vector_store %arg22[%c0_70, %c0_71, %c0_72], %142 {strides = array<i32>} : memref<1x8x256xf32, #tpu.memory_space<vmem>>, vector<1x8x256xf32>,
    %c0_73 = arith.constant 0 : index
    %c0_74 = arith.constant 0 : index
    %c0_75 = arith.constant 0 : index
    %143 = vector.load %arg23[%c0_73, %c0_74, %c0_75] : memref<1x8x256xf32, #tpu.memory_space<vmem>>, vector<1x8x256xf32>
    %144 = vector.shape_cast %143 : vector<1x8x256xf32> to vector<8x256xf32>
    %145 = vector.shape_cast %139 : vector<8x256xf32> to vector<1x8x256xf32>
    tpu.vector_store %arg23[%c0_73, %c0_74, %c0_75], %145 {strides = array<i32>} : memref<1x8x256xf32, #tpu.memory_space<vmem>>, vector<1x8x256xf32>,
    return
  }
  func.func @transform_0(%arg0: i32) -> (i32, i32, i32) {
    %c0_i32 = arith.constant 0 : i32
    %c0_i32_0 = arith.constant 0 : i32
    %c0_i32_1 = arith.constant 0 : i32
    return %arg0, %c0_i32, %c0_i32_0 : i32, i32, i32
  }
  func.func @transform_1(%arg0: i32) -> (i32, i32) {
    %c0_i32 = arith.constant 0 : i32
    %c0_i32_0 = arith.constant 0 : i32
    %c0_i32_1 = arith.constant 0 : i32
    return %c0_i32, %c0_i32_0 : i32, i32
  }
  func.func @transform_2(%arg0: i32) -> (i32, i32) {
    %c0_i32 = arith.constant 0 : i32
    %c0_i32_0 = arith.constant 0 : i32
    %c0_i32_1 = arith.constant 0 : i32
    return %c0_i32, %c0_i32_0 : i32, i32
  }
  func.func @transform_3(%arg0: i32) -> (i32, i32) {
    %c0_i32 = arith.constant 0 : i32
    %c0_i32_0 = arith.constant 0 : i32
    %c0_i32_1 = arith.constant 0 : i32
    return %c0_i32, %c0_i32_0 : i32, i32
  }
  func.func @transform_4(%arg0: i32) -> (i32, i32) {
    %c0_i32 = arith.constant 0 : i32
    %c0_i32_0 = arith.constant 0 : i32
    %c0_i32_1 = arith.constant 0 : i32
    return %c0_i32, %c0_i32_0 : i32, i32
  }
  func.func @transform_5(%arg0: i32) -> (i32, i32) {
    %c0_i32 = arith.constant 0 : i32
    %c0_i32_0 = arith.constant 0 : i32
    %c0_i32_1 = arith.constant 0 : i32
    return %c0_i32, %c0_i32_0 : i32, i32
  }
  func.func @transform_6(%arg0: i32) -> (i32, i32) {
    %c0_i32 = arith.constant 0 : i32
    %c0_i32_0 = arith.constant 0 : i32
    %c0_i32_1 = arith.constant 0 : i32
    return %c0_i32, %c0_i32_0 : i32, i32
  }
  func.func @transform_7(%arg0: i32) -> (i32, i32) {
    %c0_i32 = arith.constant 0 : i32
    %c0_i32_0 = arith.constant 0 : i32
    %c0_i32_1 = arith.constant 0 : i32
    return %c0_i32, %c0_i32_0 : i32, i32
  }
  func.func @transform_8(%arg0: i32) -> (i32, i32) {
    %c0_i32 = arith.constant 0 : i32
    %c0_i32_0 = arith.constant 0 : i32
    %c0_i32_1 = arith.constant 0 : i32
    return %c0_i32, %c0_i32_0 : i32, i32
  }
  func.func @transform_9(%arg0: i32) -> (i32, i32) {
    %c0_i32 = arith.constant 0 : i32
    %c0_i32_0 = arith.constant 0 : i32
    %c0_i32_1 = arith.constant 0 : i32
    return %c0_i32, %c0_i32_0 : i32, i32
  }
  func.func @transform_10(%arg0: i32) -> (i32, i32) {
    %c0_i32 = arith.constant 0 : i32
    %c0_i32_0 = arith.constant 0 : i32
    %c0_i32_1 = arith.constant 0 : i32
    return %c0_i32, %c0_i32_0 : i32, i32
  }
  func.func @transform_11(%arg0: i32) -> (i32, i32) {
    %c0_i32 = arith.constant 0 : i32
    %c0_i32_0 = arith.constant 0 : i32
    %c0_i32_1 = arith.constant 0 : i32
    return %c0_i32, %c0_i32_0 : i32, i32
  }
  func.func @transform_12(%arg0: i32) -> (i32, i32) {
    %c0_i32 = arith.constant 0 : i32
    %c0_i32_0 = arith.constant 0 : i32
    %c0_i32_1 = arith.constant 0 : i32
    return %c0_i32, %c0_i32_0 : i32, i32
  }
  func.func @transform_13(%arg0: i32) -> (i32, i32) {
    %c0_i32 = arith.constant 0 : i32
    %c0_i32_0 = arith.constant 0 : i32
    %c0_i32_1 = arith.constant 0 : i32
    return %c0_i32, %c0_i32_0 : i32, i32
  }
  func.func @transform_14(%arg0: i32) -> (i32, i32) {
    %c0_i32 = arith.constant 0 : i32
    %c0_i32_0 = arith.constant 0 : i32
    %c0_i32_1 = arith.constant 0 : i32
    return %c0_i32, %c0_i32_0 : i32, i32
  }
  func.func @transform_15(%arg0: i32) -> (i32, i32) {
    %c0_i32 = arith.constant 0 : i32
    %c0_i32_0 = arith.constant 0 : i32
    %c0_i32_1 = arith.constant 0 : i32
    return %c0_i32, %c0_i32_0 : i32, i32
  }
  func.func @transform_16(%arg0: i32) -> (i32, i32) {
    %c0_i32 = arith.constant 0 : i32
    %c0_i32_0 = arith.constant 0 : i32
    %c0_i32_1 = arith.constant 0 : i32
    return %c0_i32, %c0_i32_0 : i32, i32
  }
  func.func @transform_17(%arg0: i32) -> (i32, i32) {
    %c0_i32 = arith.constant 0 : i32
    %c0_i32_0 = arith.constant 0 : i32
    %c0_i32_1 = arith.constant 0 : i32
    return %c0_i32, %c0_i32_0 : i32, i32
  }
  func.func @transform_18(%arg0: i32) -> (i32, i32) {
    %c0_i32 = arith.constant 0 : i32
    %c0_i32_0 = arith.constant 0 : i32
    %c0_i32_1 = arith.constant 0 : i32
    return %c0_i32, %c0_i32_0 : i32, i32
  }
  func.func @transform_19(%arg0: i32) -> (i32, i32) {
    %c0_i32 = arith.constant 0 : i32
    %c0_i32_0 = arith.constant 0 : i32
    %c0_i32_1 = arith.constant 0 : i32
    return %c0_i32, %c0_i32_0 : i32, i32
  }
  func.func @transform_20(%arg0: i32) -> (i32, i32) {
    %c0_i32 = arith.constant 0 : i32
    %c0_i32_0 = arith.constant 0 : i32
    %c0_i32_1 = arith.constant 0 : i32
    return %c0_i32, %c0_i32_0 : i32, i32
  }
  func.func @transform_21(%arg0: i32) -> (i32, i32, i32) {
    %c0_i32 = arith.constant 0 : i32
    %c0_i32_0 = arith.constant 0 : i32
    %c0_i32_1 = arith.constant 0 : i32
    return %arg0, %c0_i32, %c0_i32_0 : i32, i32, i32
  }
  func.func @transform_22(%arg0: i32) -> (i32, i32, i32) {
    %c0_i32 = arith.constant 0 : i32
    %c0_i32_0 = arith.constant 0 : i32
    %c0_i32_1 = arith.constant 0 : i32
    return %arg0, %c0_i32, %c0_i32_0 : i32, i32, i32
  }
}

module attributes {stable_mosaic.version = 11 : i64} {
  func.func @_simsiam_loss_kernel(%arg0: i32, %arg1: memref<2x8x256xf32, #tpu.memory_space<vmem>>, %arg2: memref<2x8x256xf32, #tpu.memory_space<vmem>>, %arg3: memref<1x1xf32, #tpu.memory_space<vmem>>) attributes {dimension_semantics = [#tpu.dimension_semantics<arbitrary>], iteration_bounds = array<i64: 1>, scalar_prefetch = 0 : i64, scratch_operands = 0 : i64, tpu.core_type = #tpu.core_type<tc>, window_params = [{pipeline_mode = #tpu.pipeline_mode<synchronous>, transform_indices = @transform_0, window_bounds = array<i64: 2, 8, 256>}, {pipeline_mode = #tpu.pipeline_mode<synchronous>, transform_indices = @transform_1, window_bounds = array<i64: 2, 8, 256>}, {pipeline_mode = #tpu.pipeline_mode<synchronous>, transform_indices = @transform_2, window_bounds = array<i64: 1, 1>}]} {
    %c0 = arith.constant 0 : index
    %c0_0 = arith.constant 0 : index
    %c0_1 = arith.constant 0 : index
    %0 = vector.load %arg1[%c0, %c0_0, %c0_1] : memref<2x8x256xf32, #tpu.memory_space<vmem>>, vector<1x8x256xf32>
    %1 = vector.shape_cast %0 : vector<1x8x256xf32> to vector<8x256xf32>
    %c1 = arith.constant 1 : index
    %c0_2 = arith.constant 0 : index
    %c0_3 = arith.constant 0 : index
    %2 = vector.load %arg1[%c1, %c0_2, %c0_3] : memref<2x8x256xf32, #tpu.memory_space<vmem>>, vector<1x8x256xf32>
    %3 = vector.shape_cast %2 : vector<1x8x256xf32> to vector<8x256xf32>
    %c0_4 = arith.constant 0 : index
    %c0_5 = arith.constant 0 : index
    %c0_6 = arith.constant 0 : index
    %4 = vector.load %arg2[%c0_4, %c0_5, %c0_6] : memref<2x8x256xf32, #tpu.memory_space<vmem>>, vector<1x8x256xf32>
    %5 = vector.shape_cast %4 : vector<1x8x256xf32> to vector<8x256xf32>
    %c1_7 = arith.constant 1 : index
    %c0_8 = arith.constant 0 : index
    %c0_9 = arith.constant 0 : index
    %6 = vector.load %arg2[%c1_7, %c0_8, %c0_9] : memref<2x8x256xf32, #tpu.memory_space<vmem>>, vector<1x8x256xf32>
    %7 = vector.shape_cast %6 : vector<1x8x256xf32> to vector<8x256xf32>
    %8 = arith.mulf %5, %3 : vector<8x256xf32>
    %cst = arith.constant dense<0.000000e+00> : vector<8xf32>
    %9 = vector.multi_reduction <add>, %8, %cst [1] : vector<8x256xf32> to vector<8xf32>
    %10 = vector.shape_cast %9 : vector<8xf32> to vector<8x1xf32>
    %11 = arith.mulf %5, %5 : vector<8x256xf32>
    %cst_10 = arith.constant dense<0.000000e+00> : vector<8xf32>
    %12 = vector.multi_reduction <add>, %11, %cst_10 [1] : vector<8x256xf32> to vector<8xf32>
    %13 = vector.shape_cast %12 : vector<8xf32> to vector<8x1xf32>
    %14 = math.sqrt %13 : vector<8x1xf32>
    %cst_11 = arith.constant 9.99999993E-9 : f32
    %15 = vector.broadcast %cst_11 : f32 to vector<8x1xf32>
    %16 = arith.maximumf %14, %15 : vector<8x1xf32>
    %17 = arith.mulf %3, %3 : vector<8x256xf32>
    %cst_12 = arith.constant dense<0.000000e+00> : vector<8xf32>
    %18 = vector.multi_reduction <add>, %17, %cst_12 [1] : vector<8x256xf32> to vector<8xf32>
    %19 = vector.shape_cast %18 : vector<8xf32> to vector<8x1xf32>
    %20 = math.sqrt %19 : vector<8x1xf32>
    %cst_13 = arith.constant 9.99999993E-9 : f32
    %21 = vector.broadcast %cst_13 : f32 to vector<8x1xf32>
    %22 = arith.maximumf %20, %21 : vector<8x1xf32>
    %23 = arith.mulf %16, %22 : vector<8x1xf32>
    %24 = arith.divf %10, %23 : vector<8x1xf32>
    %25 = vector.shape_cast %24 : vector<8x1xf32> to vector<1x8x1xf32>
    %cst_14 = arith.constant dense<0.000000e+00> : vector<1xf32>
    %26 = vector.multi_reduction <add>, %25, %cst_14 [1, 2] : vector<1x8x1xf32> to vector<1xf32>
    %27 = vector.shape_cast %26 : vector<1xf32> to vector<1x1x1xf32>
    %28 = vector.extract %27[0, 0, 0] : f32 from vector<1x1x1xf32>
    %cst_15 = arith.constant 8.000000e+00 : f32
    %29 = arith.divf %28, %cst_15 : f32
    %cst_16 = arith.constant 0.000000e+00 : f32
    %30 = arith.subf %cst_16, %29 : f32
    %cst_17 = arith.constant 5.000000e-01 : f32
    %31 = arith.mulf %cst_17, %30 : f32
    %32 = arith.mulf %7, %1 : vector<8x256xf32>
    %cst_18 = arith.constant dense<0.000000e+00> : vector<8xf32>
    %33 = vector.multi_reduction <add>, %32, %cst_18 [1] : vector<8x256xf32> to vector<8xf32>
    %34 = vector.shape_cast %33 : vector<8xf32> to vector<8x1xf32>
    %35 = arith.mulf %7, %7 : vector<8x256xf32>
    %cst_19 = arith.constant dense<0.000000e+00> : vector<8xf32>
    %36 = vector.multi_reduction <add>, %35, %cst_19 [1] : vector<8x256xf32> to vector<8xf32>
    %37 = vector.shape_cast %36 : vector<8xf32> to vector<8x1xf32>
    %38 = math.sqrt %37 : vector<8x1xf32>
    %cst_20 = arith.constant 9.99999993E-9 : f32
    %39 = vector.broadcast %cst_20 : f32 to vector<8x1xf32>
    %40 = arith.maximumf %38, %39 : vector<8x1xf32>
    %41 = arith.mulf %1, %1 : vector<8x256xf32>
    %cst_21 = arith.constant dense<0.000000e+00> : vector<8xf32>
    %42 = vector.multi_reduction <add>, %41, %cst_21 [1] : vector<8x256xf32> to vector<8xf32>
    %43 = vector.shape_cast %42 : vector<8xf32> to vector<8x1xf32>
    %44 = math.sqrt %43 : vector<8x1xf32>
    %cst_22 = arith.constant 9.99999993E-9 : f32
    %45 = vector.broadcast %cst_22 : f32 to vector<8x1xf32>
    %46 = arith.maximumf %44, %45 : vector<8x1xf32>
    %47 = arith.mulf %40, %46 : vector<8x1xf32>
    %48 = arith.divf %34, %47 : vector<8x1xf32>
    %49 = vector.shape_cast %48 : vector<8x1xf32> to vector<1x8x1xf32>
    %cst_23 = arith.constant dense<0.000000e+00> : vector<1xf32>
    %50 = vector.multi_reduction <add>, %49, %cst_23 [1, 2] : vector<1x8x1xf32> to vector<1xf32>
    %51 = vector.shape_cast %50 : vector<1xf32> to vector<1x1x1xf32>
    %52 = vector.extract %51[0, 0, 0] : f32 from vector<1x1x1xf32>
    %cst_24 = arith.constant 8.000000e+00 : f32
    %53 = arith.divf %52, %cst_24 : f32
    %cst_25 = arith.constant 0.000000e+00 : f32
    %54 = arith.subf %cst_25, %53 : f32
    %cst_26 = arith.constant 5.000000e-01 : f32
    %55 = arith.mulf %cst_26, %54 : f32
    %56 = arith.addf %31, %55 : f32
    %57 = vector.broadcast %56 : f32 to vector<1x1xf32>
    %c0_27 = arith.constant 0 : index
    %c0_28 = arith.constant 0 : index
    %58 = vector.load %arg3[%c0_27, %c0_28] : memref<1x1xf32, #tpu.memory_space<vmem>>, vector<1x1xf32>
    tpu.vector_store %arg3[%c0_27, %c0_28], %57 {strides = array<i32>} : memref<1x1xf32, #tpu.memory_space<vmem>>, vector<1x1xf32>,
    return
  }
  func.func @transform_0(%arg0: i32) -> (i32, i32, i32) {
    %c0_i32 = arith.constant 0 : i32
    %c0_i32_0 = arith.constant 0 : i32
    %c0_i32_1 = arith.constant 0 : i32
    %c0_i32_2 = arith.constant 0 : i32
    return %c0_i32, %c0_i32_0, %c0_i32_1 : i32, i32, i32
  }
  func.func @transform_1(%arg0: i32) -> (i32, i32, i32) {
    %c0_i32 = arith.constant 0 : i32
    %c0_i32_0 = arith.constant 0 : i32
    %c0_i32_1 = arith.constant 0 : i32
    %c0_i32_2 = arith.constant 0 : i32
    return %c0_i32, %c0_i32_0, %c0_i32_1 : i32, i32, i32
  }
  func.func @transform_2(%arg0: i32) -> (i32, i32) {
    %c0_i32 = arith.constant 0 : i32
    %c0_i32_0 = arith.constant 0 : i32
    %c0_i32_1 = arith.constant 0 : i32
    return %c0_i32, %c0_i32_0 : i32, i32
  }
}

</mosaic_0001>

<llo_original>
// kernel: simsiam_forward.3
$region0: #{simsiam_forward.3}
  #allocation0 [shape = 'u32[]', space=smem, size = 0x4, offset = 0x4, fixed_abs, tag = 'smem constant byte address 0x4 - core index']
  #allocation1 [shape = 'u32[72,128]{1,0:T(1,128)}', space=vmem, size = 0x9000, scoped, tag = 'internal scratch']
  %s0 = inlined_call_operand.vmem [shape: f32[2,8,256], index: 0, kind: input, shape index: {}]
  %s1 = inlined_call_operand.vmem [shape: f32[2,8,256], index: 1, kind: input, shape index: {}]
  %s2 = inlined_call_operand.hbm [shape: f32[1,1], index: 2, kind: output, shape index: {}]
  %s3 = sld [smem:[#allocation0]]
  $region18: #{simsiam_forward.3} parent=0
    _
  %s5 = ssub.s32 1, %s3
  %s6 = scalar_select 0, %s5, %s3
  $region1: #{simsiam_forward.3} parent=0
    #allocation2 [shape = 'u8[512]{0}', space=vmem, size = 0x400, scoped, tag = 'output window, operand 0, single buffered']
    #allocation3 [shape = 's32[1]{0}', space=sflag, size = 0x4, scoped, tag = 'scoped memory for simsiam_forward.3']
    %7 = vsyncpa [#allocation3], 0
    // Predicated region
    $region2: #{simsiam_forward.3} parent=1 // pred_check
      _
    $region3: #{simsiam_forward.3} parent=1 // pred_check_branch
      %9 = sbr.rel (0) target = $region5
    $region4: #{simsiam_forward.3} parent=1 // pred_region
      _
    $region5: #{simsiam_forward.3} parent=1 // pred_fallthru
      _
    // Predicated region
    $region6: #{simsiam_forward.3} parent=1 // pred_check
      _
    $region7: #{simsiam_forward.3} parent=1 // pred_check_branch
      %11 = sbr.rel (0) target = $region9
    $region8: #{simsiam_forward.3} parent=1 // pred_region
      _
    $region9: #{simsiam_forward.3} parent=1 // pred_fallthru
      _
    %v12 = vld [vmem:[%s0] sm:$0xff]
    %v13 = vld [vmem:[%s0 + $0x8] sm:$0xff]
    %s14 = scalar_lea.vmem %s0, 16
    %v15 = vld [vmem:[%s14] sm:$0xff]
    %v16 = vld [vmem:[%s14 + $0x8] sm:$0xff]
    %v17 = vld [vmem:[%s1] sm:$0xff]
    %v18 = vld [vmem:[%s1 + $0x8] sm:$0xff]
    %s19 = scalar_lea.vmem %s1, 16
    %v20 = vld [vmem:[%s19] sm:$0xff]
    %v21 = vld [vmem:[%s19 + $0x8] sm:$0xff]
    %v22 = vmul.f32 %v17, %v15
    %v23 = vmul.f32 %v18, %v16
    %v24 = vadd.f32 %v22, %v23
    %25 = vadd.xlane.f32.xlu0 %v24
    %v26 = vpop.xlane.xlu0 %25
    %v27 = vmul.f32 %v17, %v17
    %v28 = vmul.f32 %v18, %v18
    %v29 = vadd.f32 %v27, %v28
    %30 = vadd.xlane.f32.xlu0 %v29
    %v31 = vpop.xlane.xlu0 %30
    %v32 = vrsqrt.pop %v31
    %v33 = vmul.f32 %v32, %v31
    %v34 = vmul.f32 %v33, %v32
    %v35 = vmul.f32 0.5, %v34
    %v36 = vsub.f32 1.5, %v35
    %v37 = vmul.f32 %v32, %v36
    %v38 = vmul.f32 %v31, %v37
    %vm39 = vcmp.eq.f32.partialorder %v31, inf
    %v40 = vsel %vm39, %v31, %v38
    %vm41 = vcmp.eq.f32.partialorder %v31, 0.0
    %v42 = vand.u32 %v31, 2147483648
    %v43 = vsel %vm41, %v42, %v40
    %v44 = vmax.f32 %v43, 1e-08
    %v45 = vmul.f32 %v15, %v15
    %v46 = vmul.f32 %v16, %v16
    %v47 = vadd.f32 %v45, %v46
    %48 = vadd.xlane.f32.xlu0 %v47
    %v49 = vpop.xlane.xlu0 %48
    %v50 = vrsqrt.pop %v49
    %v51 = vmul.f32 %v50, %v49
    %v52 = vmul.f32 %v51, %v50
    %v53 = vmul.f32 0.5, %v52
    %v54 = vsub.f32 1.5, %v53
    %v55 = vmul.f32 %v50, %v54
    %v56 = vmul.f32 %v49, %v55
    %vm57 = vcmp.eq.f32.partialorder %v49, inf
    %v58 = vsel %vm57, %v49, %v56
    %vm59 = vcmp.eq.f32.partialorder %v49, 0.0
    %v60 = vand.u32 %v49, 2147483648
    %v61 = vsel %vm59, %v60, %v58
    %v62 = vmax.f32 %v61, 1e-08
    %v63 = vmul.f32 %v44, %v62
    %v64 = vrcp.pop %v63
    %v65 = vmul.f32 %v63, %v64
    %v66 = vsub.f32 1.0, %v65
    %v67 = vmul.f32 %v64, %v66
    %v68 = vadd.f32 %v64, %v67
    %vm69 = vweird.f32 %v63
    %vm70 = vweird.f32 %v64
    %vm71 = vmor %vm69, %vm70
    %v72 = vsel %vm71, %v64, %v68
    %v73 = vand.u32 2147483647, %v63
    %vm74 = vcmp.eq.f32.partialorder %v73, 8.507059e+37
    %v75 = vand.u32 %v63, 2147483648
    %v76 = vor.u32 1.1754944e-38, %v75
    %v77 = vsel %vm74, %v76, %v72
    %v78 = vmul.f32 %v26, %v77
    %vm79 = vcmask 7168
    %v80 = vsel %vm79, %v78, 0.0
    %81 = vadd.xlane.f32.xlu0 %v80
    %v82 = vpop.xlane.xlu0 %81
    %v83 = vrot.slane %v82, 4
    %v84 = vadd.f32 %v82, %v83
    %v85 = vrot.slane %v84, 2
    %v86 = vadd.f32 %v84, %v85
    %v87 = vrot.slane %v86, 1
    %v88 = vadd.f32 %v86, %v87
    %s89 = vtos %v88
    %v90 = vrcp.pop 8.0
    %v91 = vmul.f32 8.0, %v90
    %v92 = vsub.f32 1.0, %v91
    %v93 = vmul.f32 %v90, %v92
    %v94 = vadd.f32 %v90, %v93
    %vm95 = vweird.f32 %v90
    %v96 = vsel %vm95, %v90, %v94
    %s97 = vtos %v96
    %s98 = smul.f32 %s89, %s97
    %s99 = ssub.f32 0.0, %s98
    %s100 = smul.f32 %s99, 0.5
    %v101 = vmul.f32 %v20, %v12
    %v102 = vmul.f32 %v21, %v13
    %v103 = vadd.f32 %v101, %v102
    %104 = vadd.xlane.f32.xlu0 %v103
    %v105 = vpop.xlane.xlu0 %104
    %v106 = vmul.f32 %v20, %v20
    %v107 = vmul.f32 %v21, %v21
    %v108 = vadd.f32 %v106, %v107
    %109 = vadd.xlane.f32.xlu0 %v108
    %v110 = vpop.xlane.xlu0 %109
    %v111 = vrsqrt.pop %v110
    %v112 = vmul.f32 %v111, %v110
    %v113 = vmul.f32 %v112, %v111
    %v114 = vmul.f32 0.5, %v113
    %v115 = vsub.f32 1.5, %v114
    %v116 = vmul.f32 %v111, %v115
    %v117 = vmul.f32 %v110, %v116
    %vm118 = vcmp.eq.f32.partialorder %v110, inf
    %v119 = vsel %vm118, %v110, %v117
    %vm120 = vcmp.eq.f32.partialorder %v110, 0.0
    %v121 = vand.u32 %v110, 2147483648
    %v122 = vsel %vm120, %v121, %v119
    %v123 = vmax.f32 %v122, 1e-08
    %v124 = vmul.f32 %v12, %v12
    %v125 = vmul.f32 %v13, %v13
    %v126 = vadd.f32 %v124, %v125
    %127 = vadd.xlane.f32.xlu0 %v126
    %v128 = vpop.xlane.xlu0 %127
    %v129 = vrsqrt.pop %v128
    %v130 = vmul.f32 %v129, %v128
    %v131 = vmul.f32 %v130, %v129
    %v132 = vmul.f32 0.5, %v131
    %v133 = vsub.f32 1.5, %v132
    %v134 = vmul.f32 %v129, %v133
    %v135 = vmul.f32 %v128, %v134
    %vm136 = vcmp.eq.f32.partialorder %v128, inf
    %v137 = vsel %vm136, %v128, %v135
    %vm138 = vcmp.eq.f32.partialorder %v128, 0.0
    %v139 = vand.u32 %v128, 2147483648
    %v140 = vsel %vm138, %v139, %v137
    %v141 = vmax.f32 %v140, 1e-08
    %v142 = vmul.f32 %v123, %v141
    %v143 = vrcp.pop %v142
    %v144 = vmul.f32 %v142, %v143
    %v145 = vsub.f32 1.0, %v144
    %v146 = vmul.f32 %v143, %v145
    %v147 = vadd.f32 %v143, %v146
    %vm148 = vweird.f32 %v142
    %vm149 = vweird.f32 %v143
    %vm150 = vmor %vm148, %vm149
    %v151 = vsel %vm150, %v143, %v147
    %v152 = vand.u32 2147483647, %v142
    %vm153 = vcmp.eq.f32.partialorder %v152, 8.507059e+37
    %v154 = vand.u32 %v142, 2147483648
    %v155 = vor.u32 1.1754944e-38, %v154
    %v156 = vsel %vm153, %v155, %v151
    %v157 = vmul.f32 %v105, %v156
    %v158 = vsel %vm79, %v157, 0.0
    %159 = vadd.xlane.f32.xlu0 %v158
    %v160 = vpop.xlane.xlu0 %159
    %v161 = vrot.slane %v160, 4
    %v162 = vadd.f32 %v160, %v161
    %v163 = vrot.slane %v162, 2
    %v164 = vadd.f32 %v162, %v163
    %v165 = vrot.slane %v164, 1
    %v166 = vadd.f32 %v164, %v165
    %s167 = vtos %v166
    %v168 = vrcp.pop 8.0
    %v169 = vmul.f32 8.0, %v168
    %v170 = vsub.f32 1.0, %v169
    %v171 = vmul.f32 %v168, %v170
    %v172 = vadd.f32 %v168, %v171
    %vm173 = vweird.f32 %v168
    %v174 = vsel %vm173, %v168, %v172
    %s175 = vtos %v174
    %s176 = smul.f32 %s167, %s175
    %s177 = ssub.f32 0.0, %s176
    %s178 = smul.f32 %s177, 0.5
    %s179 = sadd.f32 %s100, %s178
    %v180 = vstv %s179
    %vm181 = vcmask 0
    %182 = vst.msk [vmem:[#allocation2] sm:$0x1] %vm181, %v180
    // Predicated region
    $region10: #{simsiam_forward.3} parent=1 // pred_check
      _
    $region11: #{simsiam_forward.3} parent=1 // pred_check_branch
      %184 = sbr.rel (0) target = $region13
    $region12: #{simsiam_forward.3} parent=1 // pred_region
      %186 = vsyncadd [#allocation3], 0
      %s188 = sshll.u32 [#allocation2], 4
      %s189 = int_to_ptr.vmem [resolvable:$true] %s188
      %s190 = sshll.u32 %s2, 4
      %s191 = int_to_ptr.hbm [resolvable:$true] %s190
      %193 = dma.vmem_to_hbm [thread:$0]  %s189, 16, %s191, [#allocation3]
    $region13: #{simsiam_forward.3} parent=1 // pred_fallthru
      _
    // Predicated region
    $region14: #{simsiam_forward.3} parent=1 // pred_check
      _
    $region15: #{simsiam_forward.3} parent=1 // pred_check_branch
      %195 = sbr.rel (0) target = $region17
    $region16: #{simsiam_forward.3} parent=1 // pred_region
      %197 = dma.done [#allocation3], 16
    $region17: #{simsiam_forward.3} parent=1 // pred_fallthru
      _
    %198 = vsyncpa [#allocation3], 1

// kernel: simsiam_forward.2
$region0: #{simsiam_forward.2}
  #allocation0 [shape = 'u32[]', space=smem, size = 0x4, offset = 0x4, fixed_abs, tag = 'smem constant byte address 0x4 - core index']
  #allocation1 [shape = 'u32[72,128]{1,0:T(1,128)}', space=vmem, size = 0x9000, scoped, tag = 'internal scratch']
  %s0 = inlined_call_operand.vmem [shape: f32[2,8,256], index: 0, kind: input, shape index: {}]
  %s1 = inlined_call_operand.hbm [shape: bf16[256,128], index: 1, kind: input, shape index: {}]
  %s2 = inlined_call_operand.vmem [shape: f32[1,128], index: 2, kind: input, shape index: {}]
  %s3 = inlined_call_operand.hbm [shape: bf16[128,256], index: 3, kind: input, shape index: {}]
  %s4 = inlined_call_operand.vmem [shape: f32[1,256], index: 4, kind: input, shape index: {}]
  %s5 = inlined_call_operand.vmem [shape: f32[1,256], index: 5, kind: input, shape index: {}]
  %s6 = inlined_call_operand.vmem [shape: f32[1,256], index: 6, kind: input, shape index: {}]
  %s7 = inlined_call_operand.vmem [shape: bf16[256,256], index: 7, kind: input, shape index: {}]
  %s8 = inlined_call_operand.vmem [shape: f32[1,256], index: 8, kind: input, shape index: {}]
  %s9 = inlined_call_operand.vmem [shape: f32[1,256], index: 9, kind: input, shape index: {}]
  %s10 = inlined_call_operand.vmem [shape: f32[1,256], index: 10, kind: input, shape index: {}]
  %s11 = inlined_call_operand.hbm [shape: bf16[256,256], index: 11, kind: input, shape index: {}]
  %s12 = inlined_call_operand.vmem [shape: f32[1,256], index: 12, kind: input, shape index: {}]
  %s13 = inlined_call_operand.vmem [shape: f32[1,256], index: 13, kind: input, shape index: {}]
  %s14 = inlined_call_operand.vmem [shape: f32[1,256], index: 14, kind: input, shape index: {}]
  %s15 = inlined_call_operand.hbm [shape: bf16[256,128], index: 15, kind: input, shape index: {}]
  %s16 = inlined_call_operand.vmem [shape: f32[1,128], index: 16, kind: input, shape index: {}]
  %s17 = inlined_call_operand.vmem [shape: f32[1,128], index: 17, kind: input, shape index: {}]
  %s18 = inlined_call_operand.vmem [shape: f32[1,128], index: 18, kind: input, shape index: {}]
  %s19 = inlined_call_operand.hbm [shape: bf16[128,256], index: 19, kind: input, shape index: {}]
  %s20 = inlined_call_operand.vmem [shape: f32[1,256], index: 20, kind: input, shape index: {}]
  %s21 = inlined_call_operand.vmem [shape: f32[2,8,256], index: 21, kind: output, shape index: {0}]
  %s22 = inlined_call_operand.vmem [shape: f32[2,8,256], index: 22, kind: output, shape index: {1}]
  %23 = xla_tuple %s21, %s22
  %s24 = sld [smem:[#allocation0]]
  $region145: #{simsiam_forward.2} parent=0
    _
  %s26 = ssub.s32 1, %s24
  %s27 = scalar_select 0, %s26, %s24
  $region1: #{simsiam_forward.2} parent=0
    #allocation2 [shape = 'u8[65536]{0}', space=vmem, size = 0x10000, scoped, tag = 'input window, operand 1, single buffered']
    #allocation3 [shape = 's32[2]{0}', space=sflag, size = 0x8, scoped, tag = 'scoped memory for simsiam_forward.2']
    #allocation4 [shape = 'u8[65536]{0}', space=vmem, size = 0x10000, scoped, tag = 'input window, operand 3, single buffered']
    #allocation5 [shape = 's32[1]{0}', space=sflag, size = 0x4, scoped, tag = 'scoped memory for simsiam_forward.2']
    #allocation6 [shape = 'u8[131072]{0}', space=vmem, size = 0x20000, scoped, tag = 'input window, operand 11, single buffered']
    #allocation7 [shape = 'u8[65536]{0}', space=vmem, size = 0x10000, scoped, tag = 'input window, operand 15, single buffered']
    #allocation8 [shape = 's32[1]{0}', space=sflag, size = 0x4, scoped, tag = 'scoped memory for simsiam_forward.2']
    #allocation9 [shape = 'u8[65536]{0}', space=vmem, size = 0x10000, scoped, tag = 'input window, operand 19, single buffered']
    %28 = vsyncpa [#allocation3], 0
    %29 = vsyncpa [#allocation5], 0
    %30 = vsyncpa [#allocation8], 0
    loop: start=0, step=1, limit=4
    $region2: #{simsiam_forward.2} parent=1 // loop_pre_header
      _
    $region3: #{simsiam_forward.2} parent=1 // loop_header
      %s32 = sphi 0, %s36
      %p33 = scmp.ge.s32.totalorder %s32, 4
      %s42 = sphi 0, %s44
      %s45 = sphi 0, %s42
      %s46 = sphi 0, %s45
      %s62 = sphi 0, %s46
      %s66 = sphi 0, %s66
      %s68 = sphi 0, %s66
      %s69 = sphi 0, %s68
      %s83 = sphi 0, %s69
      %s87 = sphi 0, %s87
      %s89 = sphi 0, %s87
      %s90 = sphi 0, %s89
      %s104 = sphi 0, %s90
      %s108 = sphi 0, %s108
      %s110 = sphi 0, %s108
      %s111 = sphi 0, %s110
      %s125 = sphi 0, %s111
      %s129 = sphi 0, %s129
      %s131 = sphi 0, %s129
      %s132 = sphi 0, %s131
      %s146 = sphi 0, %s132
      %s150 = sphi 0, %s150
      %s152 = sphi 0, %s150
      %s153 = sphi 0, %s152
      %s167 = sphi 0, %s153
      %s171 = sphi 0, %s171
      %s173 = sphi 0, %s171
      %s174 = sphi 0, %s173
      %s188 = sphi 0, %s174
      %s192 = sphi 0, %s192
      %s194 = sphi 0, %s192
      %s195 = sphi 0, %s194
      %s209 = sphi 0, %s195
      %s213 = sphi 0, %s213
      %s215 = sphi 0, %s213
      %s216 = sphi 0, %s215
      %s230 = sphi 0, %s216
      %s234 = sphi 0, %s234
      %s236 = sphi 0, %s234
      %s237 = sphi 0, %s236
      %s251 = sphi 0, %s237
      %s255 = sphi 0, %s255
      %s257 = sphi 0, %s255
      %s258 = sphi 0, %s257
      %s272 = sphi 0, %s258
      %s276 = sphi 0, %s276
      %s278 = sphi 0, %s276
      %s279 = sphi 0, %s278
      %s293 = sphi 0, %s279
      %s297 = sphi 0, %s297
      %s299 = sphi 0, %s297
      %s300 = sphi 0, %s299
      %s314 = sphi 0, %s300
      %s318 = sphi 0, %s318
      %s320 = sphi 0, %s318
      %s321 = sphi 0, %s320
      %s335 = sphi 0, %s321
      %s339 = sphi 0, %s339
      %s341 = sphi 0, %s339
      %s342 = sphi 0, %s341
      %s356 = sphi 0, %s342
      %s360 = sphi 0, %s360
      %s362 = sphi 0, %s360
      %s363 = sphi 0, %s362
      %s377 = sphi 0, %s363
      %s381 = sphi 0, %s381
      %s383 = sphi 0, %s381
      %s384 = sphi 0, %s383
      %s398 = sphi 0, %s384
      %s402 = sphi 0, %s402
      %s404 = sphi 0, %s402
      %s405 = sphi 0, %s404
      %s419 = sphi 0, %s405
      %s423 = sphi 0, %s423
      %s425 = sphi 0, %s423
      %s426 = sphi 0, %s425
      %s440 = sphi 0, %s426
      %s444 = sphi 0, %s444
      %s446 = sphi 0, %s444
      %s447 = sphi 0, %s446
      %s461 = sphi 0, %s447
      %s465 = sphi 0, %s465
      %s467 = sphi 0, %s465
      %s468 = sphi 0, %s467
      %s482 = sphi 0, %s468
      %s488 = sphi 0, %s490
      %s491 = sphi 0, %s488
      %s492 = sphi 0, %s491
      %s508 = sphi 0, %s492
      %s514 = sphi 0, %s516
      %s517 = sphi 0, %s514
      %s518 = sphi 0, %s517
      %s534 = sphi 0, %s518
    $region4: #{simsiam_forward.2} parent=1 // loop_header_branch
      %35 = sbr.rel (%p33) target = $region8
    $region5: #{simsiam_forward.2} parent=1 // loop_body
      %s37 = ssub.s32 %s32, 1
      %s38 = ssub.s32 %s32, 2
      %s39 = sadd.s32 %s32, 1
      %s40 = ssub.s32 %s32, %s39
      %p41 = scmp.eq.s32.totalorder %s40, 0
      %s43 = sadd.s32 %s42, 1
      %s44 = scalar_select %p41, %s42, %s43
      %p47 = pneg %p41
      %p48 = scmp.eq.s32.totalorder %s32, 1
      %p49 = por %p47, %p48
      %p50 = scmp.ne.s32.totalorder %s42, %s45
      %p51 = scmp.eq.s32.totalorder %s32, 0
      %p52 = por %p50, %p51
      %p53 = scmp.ne.s32.totalorder %s42, %s45
      %p54 = scmp.eq.s32.totalorder %s37, 1
      %p55 = por %p53, %p54
      %p56 = scmp.ne.s32.totalorder %s45, %s46
      %p57 = scmp.eq.s32.totalorder %s37, 0
      %p58 = por %p56, %p57
      %p59 = scmp.ne.s32.totalorder %s45, %s46
      %p60 = scmp.eq.s32.totalorder %s38, 1
      %p61 = por %p59, %p60
      %p63 = scmp.ne.s32.totalorder %s46, %s62
      %p64 = scmp.eq.s32.totalorder %s38, 0
      %p65 = por %p63, %p64
      %s67 = sadd.s32 %s66, 1
      %p70 = scmp.eq.s32.totalorder %s32, 1
      %p71 = scmp.ne.s32.totalorder %s66, %s68
      %p72 = scmp.eq.s32.totalorder %s32, 0
      %p73 = por %p71, %p72
      %p74 = scmp.ne.s32.totalorder %s66, %s68
      %p75 = scmp.eq.s32.totalorder %s37, 1
      %p76 = por %p74, %p75
      %p77 = scmp.ne.s32.totalorder %s68, %s69
      %p78 = scmp.eq.s32.totalorder %s37, 0
      %p79 = por %p77, %p78
      %p80 = scmp.ne.s32.totalorder %s68, %s69
      %p81 = scmp.eq.s32.totalorder %s38, 1
      %p82 = por %p80, %p81
      %p84 = scmp.ne.s32.totalorder %s69, %s83
      %p85 = scmp.eq.s32.totalorder %s38, 0
      %p86 = por %p84, %p85
      %s88 = sadd.s32 %s87, 1
      %p91 = scmp.eq.s32.totalorder %s32, 1
      %p92 = scmp.ne.s32.totalorder %s87, %s89
      %p93 = scmp.eq.s32.totalorder %s32, 0
      %p94 = por %p92, %p93
      %p95 = scmp.ne.s32.totalorder %s87, %s89
      %p96 = scmp.eq.s32.totalorder %s37, 1
      %p97 = por %p95, %p96
      %p98 = scmp.ne.s32.totalorder %s89, %s90
      %p99 = scmp.eq.s32.totalorder %s37, 0
      %p100 = por %p98, %p99
      %p101 = scmp.ne.s32.totalorder %s89, %s90
      %p102 = scmp.eq.s32.totalorder %s38, 1
      %p103 = por %p101, %p102
      %p105 = scmp.ne.s32.totalorder %s90, %s104
      %p106 = scmp.eq.s32.totalorder %s38, 0
      %p107 = por %p105, %p106
      %s109 = sadd.s32 %s108, 1
      %p112 = scmp.eq.s32.totalorder %s32, 1
      %p113 = scmp.ne.s32.totalorder %s108, %s110
      %p114 = scmp.eq.s32.totalorder %s32, 0
      %p115 = por %p113, %p114
      %p116 = scmp.ne.s32.totalorder %s108, %s110
      %p117 = scmp.eq.s32.totalorder %s37, 1
      %p118 = por %p116, %p117
      %p119 = scmp.ne.s32.totalorder %s110, %s111
      %p120 = scmp.eq.s32.totalorder %s37, 0
      %p121 = por %p119, %p120
      %p122 = scmp.ne.s32.totalorder %s110, %s111
      %p123 = scmp.eq.s32.totalorder %s38, 1
      %p124 = por %p122, %p123
      %p126 = scmp.ne.s32.totalorder %s111, %s125
      %p127 = scmp.eq.s32.totalorder %s38, 0
      %p128 = por %p126, %p127
      %s130 = sadd.s32 %s129, 1
      %p133 = scmp.eq.s32.totalorder %s32, 1
      %p134 = scmp.ne.s32.totalorder %s129, %s131
      %p135 = scmp.eq.s32.totalorder %s32, 0
      %p136 = por %p134, %p135
      %p137 = scmp.ne.s32.totalorder %s129, %s131
      %p138 = scmp.eq.s32.totalorder %s37, 1
      %p139 = por %p137, %p138
      %p140 = scmp.ne.s32.totalorder %s131, %s132
      %p141 = scmp.eq.s32.totalorder %s37, 0
      %p142 = por %p140, %p141
      %p143 = scmp.ne.s32.totalorder %s131, %s132
      %p144 = scmp.eq.s32.totalorder %s38, 1
      %p145 = por %p143, %p144
      %p147 = scmp.ne.s32.totalorder %s132, %s146
      %p148 = scmp.eq.s32.totalorder %s38, 0
      %p149 = por %p147, %p148
      %s151 = sadd.s32 %s150, 1
      %p154 = scmp.eq.s32.totalorder %s32, 1
      %p155 = scmp.ne.s32.totalorder %s150, %s152
      %p156 = scmp.eq.s32.totalorder %s32, 0
      %p157 = por %p155, %p156
      %p158 = scmp.ne.s32.totalorder %s150, %s152
      %p159 = scmp.eq.s32.totalorder %s37, 1
      %p160 = por %p158, %p159
      %p161 = scmp.ne.s32.totalorder %s152, %s153
      %p162 = scmp.eq.s32.totalorder %s37, 0
      %p163 = por %p161, %p162
      %p164 = scmp.ne.s32.totalorder %s152, %s153
      %p165 = scmp.eq.s32.totalorder %s38, 1
      %p166 = por %p164, %p165
      %p168 = scmp.ne.s32.totalorder %s153, %s167
      %p169 = scmp.eq.s32.totalorder %s38, 0
      %p170 = por %p168, %p169
      %s172 = sadd.s32 %s171, 1
      %p175 = scmp.eq.s32.totalorder %s32, 1
      %p176 = scmp.ne.s32.totalorder %s171, %s173
      %p177 = scmp.eq.s32.totalorder %s32, 0
      %p178 = por %p176, %p177
      %p179 = scmp.ne.s32.totalorder %s171, %s173
      %p180 = scmp.eq.s32.totalorder %s37, 1
      %p181 = por %p179, %p180
      %p182 = scmp.ne.s32.totalorder %s173, %s174
      %p183 = scmp.eq.s32.totalorder %s37, 0
      %p184 = por %p182, %p183
      %p185 = scmp.ne.s32.totalorder %s173, %s174
      %p186 = scmp.eq.s32.totalorder %s38, 1
      %p187 = por %p185, %p186
      %p189 = scmp.ne.s32.totalorder %s174, %s188
      %p190 = scmp.eq.s32.totalorder %s38, 0
      %p191 = por %p189, %p190
      %s193 = sadd.s32 %s192, 1
      %p196 = scmp.eq.s32.totalorder %s32, 1
      %p197 = scmp.ne.s32.totalorder %s192, %s194
      %p198 = scmp.eq.s32.totalorder %s32, 0
      %p199 = por %p197, %p198
      %p200 = scmp.ne.s32.totalorder %s192, %s194
      %p201 = scmp.eq.s32.totalorder %s37, 1
      %p202 = por %p200, %p201
      %p203 = scmp.ne.s32.totalorder %s194, %s195
      %p204 = scmp.eq.s32.totalorder %s37, 0
      %p205 = por %p203, %p204
      %p206 = scmp.ne.s32.totalorder %s194, %s195
      %p207 = scmp.eq.s32.totalorder %s38, 1
      %p208 = por %p206, %p207
      %p210 = scmp.ne.s32.totalorder %s195, %s209
      %p211 = scmp.eq.s32.totalorder %s38, 0
      %p212 = por %p210, %p211
      %s214 = sadd.s32 %s213, 1
      %p217 = scmp.eq.s32.totalorder %s32, 1
      %p218 = scmp.ne.s32.totalorder %s213, %s215
      %p219 = scmp.eq.s32.totalorder %s32, 0
      %p220 = por %p218, %p219
      %p221 = scmp.ne.s32.totalorder %s213, %s215
      %p222 = scmp.eq.s32.totalorder %s37, 1
      %p223 = por %p221, %p222
      %p224 = scmp.ne.s32.totalorder %s215, %s216
      %p225 = scmp.eq.s32.totalorder %s37, 0
      %p226 = por %p224, %p225
      %p227 = scmp.ne.s32.totalorder %s215, %s216
      %p228 = scmp.eq.s32.totalorder %s38, 1
      %p229 = por %p227, %p228
      %p231 = scmp.ne.s32.totalorder %s216, %s230
      %p232 = scmp.eq.s32.totalorder %s38, 0
      %p233 = por %p231, %p232
      %s235 = sadd.s32 %s234, 1
      %p238 = scmp.eq.s32.totalorder %s32, 1
      %p239 = scmp.ne.s32.totalorder %s234, %s236
      %p240 = scmp.eq.s32.totalorder %s32, 0
      %p241 = por %p239, %p240
      %p242 = scmp.ne.s32.totalorder %s234, %s236
      %p243 = scmp.eq.s32.totalorder %s37, 1
      %p244 = por %p242, %p243
      %p245 = scmp.ne.s32.totalorder %s236, %s237
      %p246 = scmp.eq.s32.totalorder %s37, 0
      %p247 = por %p245, %p246
      %p248 = scmp.ne.s32.totalorder %s236, %s237
      %p249 = scmp.eq.s32.totalorder %s38, 1
      %p250 = por %p248, %p249
      %p252 = scmp.ne.s32.totalorder %s237, %s251
      %p253 = scmp.eq.s32.totalorder %s38, 0
      %p254 = por %p252, %p253
      %s256 = sadd.s32 %s255, 1
      %p259 = scmp.eq.s32.totalorder %s32, 1
      %p260 = scmp.ne.s32.totalorder %s255, %s257
      %p261 = scmp.eq.s32.totalorder %s32, 0
      %p262 = por %p260, %p261
      %p263 = scmp.ne.s32.totalorder %s255, %s257
      %p264 = scmp.eq.s32.totalorder %s37, 1
      %p265 = por %p263, %p264
      %p266 = scmp.ne.s32.totalorder %s257, %s258
      %p267 = scmp.eq.s32.totalorder %s37, 0
      %p268 = por %p266, %p267
      %p269 = scmp.ne.s32.totalorder %s257, %s258
      %p270 = scmp.eq.s32.totalorder %s38, 1
      %p271 = por %p269, %p270
      %p273 = scmp.ne.s32.totalorder %s258, %s272
      %p274 = scmp.eq.s32.totalorder %s38, 0
      %p275 = por %p273, %p274
      %s277 = sadd.s32 %s276, 1
      %p280 = scmp.eq.s32.totalorder %s32, 1
      %p281 = scmp.ne.s32.totalorder %s276, %s278
      %p282 = scmp.eq.s32.totalorder %s32, 0
      %p283 = por %p281, %p282
      %p284 = scmp.ne.s32.totalorder %s276, %s278
      %p285 = scmp.eq.s32.totalorder %s37, 1
      %p286 = por %p284, %p285
      %p287 = scmp.ne.s32.totalorder %s278, %s279
      %p288 = scmp.eq.s32.totalorder %s37, 0
      %p289 = por %p287, %p288
      %p290 = scmp.ne.s32.totalorder %s278, %s279
      %p291 = scmp.eq.s32.totalorder %s38, 1
      %p292 = por %p290, %p291
      %p294 = scmp.ne.s32.totalorder %s279, %s293
      %p295 = scmp.eq.s32.totalorder %s38, 0
      %p296 = por %p294, %p295
      %s298 = sadd.s32 %s297, 1
      %p301 = scmp.eq.s32.totalorder %s32, 1
      %p302 = scmp.ne.s32.totalorder %s297, %s299
      %p303 = scmp.eq.s32.totalorder %s32, 0
      %p304 = por %p302, %p303
      %p305 = scmp.ne.s32.totalorder %s297, %s299
      %p306 = scmp.eq.s32.totalorder %s37, 1
      %p307 = por %p305, %p306
      %p308 = scmp.ne.s32.totalorder %s299, %s300
      %p309 = scmp.eq.s32.totalorder %s37, 0
      %p310 = por %p308, %p309
      %p311 = scmp.ne.s32.totalorder %s299, %s300
      %p312 = scmp.eq.s32.totalorder %s38, 1
      %p313 = por %p311, %p312
      %p315 = scmp.ne.s32.totalorder %s300, %s314
      %p316 = scmp.eq.s32.totalorder %s38, 0
      %p317 = por %p315, %p316
      %s319 = sadd.s32 %s318, 1
      %p322 = scmp.eq.s32.totalorder %s32, 1
      %p323 = scmp.ne.s32.totalorder %s318, %s320
      %p324 = scmp.eq.s32.totalorder %s32, 0
      %p325 = por %p323, %p324
      %p326 = scmp.ne.s32.totalorder %s318, %s320
      %p327 = scmp.eq.s32.totalorder %s37, 1
      %p328 = por %p326, %p327
      %p329 = scmp.ne.s32.totalorder %s320, %s321
      %p330 = scmp.eq.s32.totalorder %s37, 0
      %p331 = por %p329, %p330
      %p332 = scmp.ne.s32.totalorder %s320, %s321
      %p333 = scmp.eq.s32.totalorder %s38, 1
      %p334 = por %p332, %p333
      %p336 = scmp.ne.s32.totalorder %s321, %s335
      %p337 = scmp.eq.s32.totalorder %s38, 0
      %p338 = por %p336, %p337
      %s340 = sadd.s32 %s339, 1
      %p343 = scmp.eq.s32.totalorder %s32, 1
      %p344 = scmp.ne.s32.totalorder %s339, %s341
      %p345 = scmp.eq.s32.totalorder %s32, 0
      %p346 = por %p344, %p345
      %p347 = scmp.ne.s32.totalorder %s339, %s341
      %p348 = scmp.eq.s32.totalorder %s37, 1
      %p349 = por %p347, %p348
      %p350 = scmp.ne.s32.totalorder %s341, %s342
      %p351 = scmp.eq.s32.totalorder %s37, 0
      %p352 = por %p350, %p351
      %p353 = scmp.ne.s32.totalorder %s341, %s342
      %p354 = scmp.eq.s32.totalorder %s38, 1
      %p355 = por %p353, %p354
      %p357 = scmp.ne.s32.totalorder %s342, %s356
      %p358 = scmp.eq.s32.totalorder %s38, 0
      %p359 = por %p357, %p358
      %s361 = sadd.s32 %s360, 1
      %p364 = scmp.eq.s32.totalorder %s32, 1
      %p365 = scmp.ne.s32.totalorder %s360, %s362
      %p366 = scmp.eq.s32.totalorder %s32, 0
      %p367 = por %p365, %p366
      %p368 = scmp.ne.s32.totalorder %s360, %s362
      %p369 = scmp.eq.s32.totalorder %s37, 1
      %p370 = por %p368, %p369
      %p371 = scmp.ne.s32.totalorder %s362, %s363
      %p372 = scmp.eq.s32.totalorder %s37, 0
      %p373 = por %p371, %p372
      %p374 = scmp.ne.s32.totalorder %s362, %s363
      %p375 = scmp.eq.s32.totalorder %s38, 1
      %p376 = por %p374, %p375
      %p378 = scmp.ne.s32.totalorder %s363, %s377
      %p379 = scmp.eq.s32.totalorder %s38, 0
      %p380 = por %p378, %p379
      %s382 = sadd.s32 %s381, 1
      %p385 = scmp.eq.s32.totalorder %s32, 1
      %p386 = scmp.ne.s32.totalorder %s381, %s383
      %p387 = scmp.eq.s32.totalorder %s32, 0
      %p388 = por %p386, %p387
      %p389 = scmp.ne.s32.totalorder %s381, %s383
      %p390 = scmp.eq.s32.totalorder %s37, 1
      %p391 = por %p389, %p390
      %p392 = scmp.ne.s32.totalorder %s383, %s384
      %p393 = scmp.eq.s32.totalorder %s37, 0
      %p394 = por %p392, %p393
      %p395 = scmp.ne.s32.totalorder %s383, %s384
      %p396 = scmp.eq.s32.totalorder %s38, 1
      %p397 = por %p395, %p396
      %p399 = scmp.ne.s32.totalorder %s384, %s398
      %p400 = scmp.eq.s32.totalorder %s38, 0
      %p401 = por %p399, %p400
      %s403 = sadd.s32 %s402, 1
      %p406 = scmp.eq.s32.totalorder %s32, 1
      %p407 = scmp.ne.s32.totalorder %s402, %s404
      %p408 = scmp.eq.s32.totalorder %s32, 0
      %p409 = por %p407, %p408
      %p410 = scmp.ne.s32.totalorder %s402, %s404
      %p411 = scmp.eq.s32.totalorder %s37, 1
      %p412 = por %p410, %p411
      %p413 = scmp.ne.s32.totalorder %s404, %s405
      %p414 = scmp.eq.s32.totalorder %s37, 0
      %p415 = por %p413, %p414
      %p416 = scmp.ne.s32.totalorder %s404, %s405
      %p417 = scmp.eq.s32.totalorder %s38, 1
      %p418 = por %p416, %p417
      %p420 = scmp.ne.s32.totalorder %s405, %s419
      %p421 = scmp.eq.s32.totalorder %s38, 0
      %p422 = por %p420, %p421
      %s424 = sadd.s32 %s423, 1
      %p427 = scmp.eq.s32.totalorder %s32, 1
      %p428 = scmp.ne.s32.totalorder %s423, %s425
      %p429 = scmp.eq.s32.totalorder %s32, 0
      %p430 = por %p428, %p429
      %p431 = scmp.ne.s32.totalorder %s423, %s425
      %p432 = scmp.eq.s32.totalorder %s37, 1
      %p433 = por %p431, %p432
      %p434 = scmp.ne.s32.totalorder %s425, %s426
      %p435 = scmp.eq.s32.totalorder %s37, 0
      %p436 = por %p434, %p435
      %p437 = scmp.ne.s32.totalorder %s425, %s426
      %p438 = scmp.eq.s32.totalorder %s38, 1
      %p439 = por %p437, %p438
      %p441 = scmp.ne.s32.totalorder %s426, %s440
      %p442 = scmp.eq.s32.totalorder %s38, 0
      %p443 = por %p441, %p442
      %s445 = sadd.s32 %s444, 1
      %p448 = scmp.eq.s32.totalorder %s32, 1
      %p449 = scmp.ne.s32.totalorder %s444, %s446
      %p450 = scmp.eq.s32.totalorder %s32, 0
      %p451 = por %p449, %p450
      %p452 = scmp.ne.s32.totalorder %s444, %s446
      %p453 = scmp.eq.s32.totalorder %s37, 1
      %p454 = por %p452, %p453
      %p455 = scmp.ne.s32.totalorder %s446, %s447
      %p456 = scmp.eq.s32.totalorder %s37, 0
      %p457 = por %p455, %p456
      %p458 = scmp.ne.s32.totalorder %s446, %s447
      %p459 = scmp.eq.s32.totalorder %s38, 1
      %p460 = por %p458, %p459
      %p462 = scmp.ne.s32.totalorder %s447, %s461
      %p463 = scmp.eq.s32.totalorder %s38, 0
      %p464 = por %p462, %p463
      %s466 = sadd.s32 %s465, 1
      %p469 = scmp.eq.s32.totalorder %s32, 1
      %p470 = scmp.ne.s32.totalorder %s465, %s467
      %p471 = scmp.eq.s32.totalorder %s32, 0
      %p472 = por %p470, %p471
      %p473 = scmp.ne.s32.totalorder %s465, %s467
      %p474 = scmp.eq.s32.totalorder %s37, 1
      %p475 = por %p473, %p474
      %p476 = scmp.ne.s32.totalorder %s467, %s468
      %p477 = scmp.eq.s32.totalorder %s37, 0
      %p478 = por %p476, %p477
      %p479 = scmp.ne.s32.totalorder %s467, %s468
      %p480 = scmp.eq.s32.totalorder %s38, 1
      %p481 = por %p479, %p480
      %p483 = scmp.ne.s32.totalorder %s468, %s482
      %p484 = scmp.eq.s32.totalorder %s38, 0
      %p485 = por %p483, %p484
      %s486 = ssub.s32 %s32, %s39
      %p487 = scmp.eq.s32.totalorder %s486, 0
      %s489 = sadd.s32 %s488, 1
      %s490 = scalar_select %p487, %s488, %s489
      %p493 = pneg %p487
      %p494 = scmp.eq.s32.totalorder %s32, 1
      %p495 = por %p493, %p494
      %p496 = scmp.ne.s32.totalorder %s488, %s491
      %p497 = scmp.eq.s32.totalorder %s32, 0
      %p498 = por %p496, %p497
      %p499 = scmp.ne.s32.totalorder %s488, %s491
      %p500 = scmp.eq.s32.totalorder %s37, 1
      %p501 = por %p499, %p500
      %p502 = scmp.ne.s32.totalorder %s491, %s492
      %p503 = scmp.eq.s32.totalorder %s37, 0
      %p504 = por %p502, %p503
      %p505 = scmp.ne.s32.totalorder %s491, %s492
      %p506 = scmp.eq.s32.totalorder %s38, 1
      %p507 = por %p505, %p506
      %p509 = scmp.ne.s32.totalorder %s492, %s508
      %p510 = scmp.eq.s32.totalorder %s38, 0
      %p511 = por %p509, %p510
      %s512 = ssub.s32 %s32, %s39
      %p513 = scmp.eq.s32.totalorder %s512, 0
      %s515 = sadd.s32 %s514, 1
      %s516 = scalar_select %p513, %s514, %s515
      %p519 = pneg %p513
      %p520 = scmp.eq.s32.totalorder %s32, 1
      %p521 = por %p519, %p520
      %p522 = scmp.ne.s32.totalorder %s514, %s517
      %p523 = scmp.eq.s32.totalorder %s32, 0
      %p524 = por %p522, %p523
      %p525 = scmp.ne.s32.totalorder %s514, %s517
      %p526 = scmp.eq.s32.totalorder %s37, 1
      %p527 = por %p525, %p526
      %p528 = scmp.ne.s32.totalorder %s517, %s518
      %p529 = scmp.eq.s32.totalorder %s37, 0
      %p530 = por %p528, %p529
      %p531 = scmp.ne.s32.totalorder %s517, %s518
      %p532 = scmp.eq.s32.totalorder %s38, 1
      %p533 = por %p531, %p532
      %p535 = scmp.ne.s32.totalorder %s518, %s534
      %p536 = scmp.eq.s32.totalorder %s38, 0
      %p537 = por %p535, %p536
      %p538 = scmp.le.s32.totalorder 1, %s32
      %p539 = scmp.lt.s32.totalorder %s32, 3
      %p540 = pnand %p538, %p539
      %p541 = pneg %p540
      // Predicated region
      $region9: #{simsiam_forward.2} parent=5 // pred_check
        _
      $region10: #{simsiam_forward.2} parent=5 // pred_check_branch
        %543 = sbr.rel (%p540) target = $region12
      $region11: #{simsiam_forward.2} parent=5 // pred_region
        %s544 = ssub.s32 %s32, 1
        // Predicated region
        $region13: #{simsiam_forward.2} parent=11 // pred_check
          %p545 = pneg %p79
        $region14: #{simsiam_forward.2} parent=11 // pred_check_branch
          %547 = sbr.rel (%p545) target = $region16
        $region15: #{simsiam_forward.2} parent=11 // pred_region
          %549 = vsyncadd [#allocation3], 0
          %s550 = sshll.u32 %s1, 4
          %s551 = int_to_ptr.hbm [resolvable:$true] %s550
          %s552 = sshll.u32 [#allocation2], 4
          %s553 = int_to_ptr.vmem [resolvable:$true] %s552
          %558 = dma.hbm_to_vmem [thread:$0]  %s551, 2048, %s553, [#allocation3], 64, 64, 4
        $region16: #{simsiam_forward.2} parent=11 // pred_fallthru
          _
        // Predicated region
        $region17: #{simsiam_forward.2} parent=11 // pred_check
          %p559 = pneg %p100
        $region18: #{simsiam_forward.2} parent=11 // pred_check_branch
          %561 = sbr.rel (%p559) target = $region20
        $region19: #{simsiam_forward.2} parent=11 // pred_region
          _
        $region20: #{simsiam_forward.2} parent=11 // pred_fallthru
          _
        // Predicated region
        $region21: #{simsiam_forward.2} parent=11 // pred_check
          %p562 = pneg %p121
        $region22: #{simsiam_forward.2} parent=11 // pred_check_branch
          %564 = sbr.rel (%p562) target = $region24
        $region23: #{simsiam_forward.2} parent=11 // pred_region
          %566 = vsyncadd [#allocation5], 0
          %s567 = sshll.u32 %s3, 4
          %s568 = int_to_ptr.hbm [resolvable:$true] %s567
          %s569 = sshll.u32 [#allocation4], 4
          %s570 = int_to_ptr.vmem [resolvable:$true] %s569
          %575 = dma.hbm_to_vmem [thread:$0]  %s568, 2048, %s570, [#allocation5], 128, 128, 8
        $region24: #{simsiam_forward.2} parent=11 // pred_fallthru
          _
        // Predicated region
        $region25: #{simsiam_forward.2} parent=11 // pred_check
          %p576 = pneg %p142
        $region26: #{simsiam_forward.2} parent=11 // pred_check_branch
          %578 = sbr.rel (%p576) target = $region28
        $region27: #{simsiam_forward.2} parent=11 // pred_region
          _
        $region28: #{simsiam_forward.2} parent=11 // pred_fallthru
          _
        // Predicated region
        $region29: #{simsiam_forward.2} parent=11 // pred_check
          %p579 = pneg %p163
        $region30: #{simsiam_forward.2} parent=11 // pred_check_branch
          %581 = sbr.rel (%p579) target = $region32
        $region31: #{simsiam_forward.2} parent=11 // pred_region
          _
        $region32: #{simsiam_forward.2} parent=11 // pred_fallthru
          _
        // Predicated region
        $region33: #{simsiam_forward.2} parent=11 // pred_check
          %p582 = pneg %p184
        $region34: #{simsiam_forward.2} parent=11 // pred_check_branch
          %584 = sbr.rel (%p582) target = $region36
        $region35: #{simsiam_forward.2} parent=11 // pred_region
          _
        $region36: #{simsiam_forward.2} parent=11 // pred_fallthru
          _
        // Predicated region
        $region37: #{simsiam_forward.2} parent=11 // pred_check
          %p585 = pneg %p205
        $region38: #{simsiam_forward.2} parent=11 // pred_check_branch
          %587 = sbr.rel (%p585) target = $region40
        $region39: #{simsiam_forward.2} parent=11 // pred_region
          _
        $region40: #{simsiam_forward.2} parent=11 // pred_fallthru
          _
        // Predicated region
        $region41: #{simsiam_forward.2} parent=11 // pred_check
          %p588 = pneg %p226
        $region42: #{simsiam_forward.2} parent=11 // pred_check_branch
          %590 = sbr.rel (%p588) target = $region44
        $region43: #{simsiam_forward.2} parent=11 // pred_region
          _
        $region44: #{simsiam_forward.2} parent=11 // pred_fallthru
          _
        // Predicated region
        $region45: #{simsiam_forward.2} parent=11 // pred_check
          %p591 = pneg %p247
        $region46: #{simsiam_forward.2} parent=11 // pred_check_branch
          %593 = sbr.rel (%p591) target = $region48
        $region47: #{simsiam_forward.2} parent=11 // pred_region
          _
        $region48: #{simsiam_forward.2} parent=11 // pred_fallthru
          _
        // Predicated region
        $region49: #{simsiam_forward.2} parent=11 // pred_check
          %p594 = pneg %p268
        $region50: #{simsiam_forward.2} parent=11 // pred_check_branch
          %596 = sbr.rel (%p594) target = $region52
        $region51: #{simsiam_forward.2} parent=11 // pred_region
          _
        $region52: #{simsiam_forward.2} parent=11 // pred_fallthru
          _
        // Predicated region
        $region53: #{simsiam_forward.2} parent=11 // pred_check
          %p597 = pneg %p289
        $region54: #{simsiam_forward.2} parent=11 // pred_check_branch
          %599 = sbr.rel (%p597) target = $region56
        $region55: #{simsiam_forward.2} parent=11 // pred_region
          %601 = vsyncadd [#allocation5], 0
          %s602 = sshll.u32 %s11, 4
          %s603 = int_to_ptr.hbm [resolvable:$true] %s602
          %s604 = sshll.u32 [#allocation6], 4
          %s605 = int_to_ptr.vmem [resolvable:$true] %s604
          %610 = dma.hbm_to_vmem [thread:$0]  %s603, 4096, %s605, [#allocation5], 128, 128, 8
        $region56: #{simsiam_forward.2} parent=11 // pred_fallthru
          _
        // Predicated region
        $region57: #{simsiam_forward.2} parent=11 // pred_check
          %p611 = pneg %p310
        $region58: #{simsiam_forward.2} parent=11 // pred_check_branch
          %613 = sbr.rel (%p611) target = $region60
        $region59: #{simsiam_forward.2} parent=11 // pred_region
          _
        $region60: #{simsiam_forward.2} parent=11 // pred_fallthru
          _
        // Predicated region
        $region61: #{simsiam_forward.2} parent=11 // pred_check
          %p614 = pneg %p331
        $region62: #{simsiam_forward.2} parent=11 // pred_check_branch
          %616 = sbr.rel (%p614) target = $region64
        $region63: #{simsiam_forward.2} parent=11 // pred_region
          _
        $region64: #{simsiam_forward.2} parent=11 // pred_fallthru
          _
        // Predicated region
        $region65: #{simsiam_forward.2} parent=11 // pred_check
          %p617 = pneg %p352
        $region66: #{simsiam_forward.2} parent=11 // pred_check_branch
          %619 = sbr.rel (%p617) target = $region68
        $region67: #{simsiam_forward.2} parent=11 // pred_region
          _
        $region68: #{simsiam_forward.2} parent=11 // pred_fallthru
          _
        // Predicated region
        $region69: #{simsiam_forward.2} parent=11 // pred_check
          %p620 = pneg %p373
        $region70: #{simsiam_forward.2} parent=11 // pred_check_branch
          %622 = sbr.rel (%p620) target = $region72
        $region71: #{simsiam_forward.2} parent=11 // pred_region
          %624 = vsyncadd [#allocation8], 0
          %s625 = sshll.u32 %s15, 4
          %s626 = int_to_ptr.hbm [resolvable:$true] %s625
          %s627 = sshll.u32 [#allocation7], 4
          %s628 = int_to_ptr.vmem [resolvable:$true] %s627
          %633 = dma.hbm_to_vmem [thread:$0]  %s626, 2048, %s628, [#allocation8], 64, 64, 4
        $region72: #{simsiam_forward.2} parent=11 // pred_fallthru
          _
        // Predicated region
        $region73: #{simsiam_forward.2} parent=11 // pred_check
          %p634 = pneg %p394
        $region74: #{simsiam_forward.2} parent=11 // pred_check_branch
          %636 = sbr.rel (%p634) target = $region76
        $region75: #{simsiam_forward.2} parent=11 // pred_region
          _
        $region76: #{simsiam_forward.2} parent=11 // pred_fallthru
          _
        // Predicated region
        $region77: #{simsiam_forward.2} parent=11 // pred_check
          %p637 = pneg %p415
        $region78: #{simsiam_forward.2} parent=11 // pred_check_branch
          %639 = sbr.rel (%p637) target = $region80
        $region79: #{simsiam_forward.2} parent=11 // pred_region
          _
        $region80: #{simsiam_forward.2} parent=11 // pred_fallthru
          _
        // Predicated region
        $region81: #{simsiam_forward.2} parent=11 // pred_check
          %p640 = pneg %p436
        $region82: #{simsiam_forward.2} parent=11 // pred_check_branch
          %642 = sbr.rel (%p640) target = $region84
        $region83: #{simsiam_forward.2} parent=11 // pred_region
          _
        $region84: #{simsiam_forward.2} parent=11 // pred_fallthru
          _
        // Predicated region
        $region85: #{simsiam_forward.2} parent=11 // pred_check
          %p643 = pneg %p457
        $region86: #{simsiam_forward.2} parent=11 // pred_check_branch
          %645 = sbr.rel (%p643) target = $region88
        $region87: #{simsiam_forward.2} parent=11 // pred_region
          %647 = vsyncadd [#allocation8], 0
          %s648 = sshll.u32 %s19, 4
          %s649 = int_to_ptr.hbm [resolvable:$true] %s648
          %s650 = sshll.u32 [#allocation9], 4
          %s651 = int_to_ptr.vmem [resolvable:$true] %s650
          %656 = dma.hbm_to_vmem [thread:$0]  %s649, 2048, %s651, [#allocation8], 128, 128, 8
        $region88: #{simsiam_forward.2} parent=11 // pred_fallthru
          _
        // Predicated region
        $region89: #{simsiam_forward.2} parent=11 // pred_check
          %p657 = pneg %p478
        $region90: #{simsiam_forward.2} parent=11 // pred_check_branch
          %659 = sbr.rel (%p657) target = $region92
        $region91: #{simsiam_forward.2} parent=11 // pred_region
          _
        $region92: #{simsiam_forward.2} parent=11 // pred_fallthru
          _
      $region12: #{simsiam_forward.2} parent=5 // pred_fallthru
        _
      %p660 = scmp.lt.s32.totalorder %s32, 2
      // Predicated region
      $region93: #{simsiam_forward.2} parent=5 // pred_check
        %p661 = pneg %p660
      $region94: #{simsiam_forward.2} parent=5 // pred_check_branch
        %663 = sbr.rel (%p661) target = $region96
      $region95: #{simsiam_forward.2} parent=5 // pred_region
        // Predicated region
        $region97: #{simsiam_forward.2} parent=95 // pred_check
          %p664 = pneg %p52
        $region98: #{simsiam_forward.2} parent=95 // pred_check_branch
          %666 = sbr.rel (%p664) target = $region100
        $region99: #{simsiam_forward.2} parent=95 // pred_region
          %p667 = scmp.lt.s32.totalorder %s32, 1
          %s668 = scalar_select %p667, %s32, 1
          %s669 = smul.addr %s668, 2
          %s670 = smul.addr %s669, 8
          %s671 = scalar_lea.vmem %s0, %s670
        $region100: #{simsiam_forward.2} parent=95 // pred_fallthru
          _
      $region96: #{simsiam_forward.2} parent=5 // pred_fallthru
        _
      %p672 = scmp.le.s32.totalorder 1, %s32
      %p673 = scmp.lt.s32.totalorder %s32, 3
      %p674 = pnand %p672, %p673
      %p675 = pneg %p674
      // Predicated region
      $region101: #{simsiam_forward.2} parent=5 // pred_check
        _
      $region102: #{simsiam_forward.2} parent=5 // pred_check_branch
        %677 = sbr.rel (%p674) target = $region104
      $region103: #{simsiam_forward.2} parent=5 // pred_region
        %s678 = ssub.s32 %s32, 1
        // Predicated region
        $region105: #{simsiam_forward.2} parent=103 // pred_check
          %p679 = pneg %p79
        $region106: #{simsiam_forward.2} parent=103 // pred_check_branch
          %681 = sbr.rel (%p679) target = $region108
        $region107: #{simsiam_forward.2} parent=103 // pred_region
          %683 = dma.done [#allocation3], 2048
        $region108: #{simsiam_forward.2} parent=103 // pred_fallthru
          _
        // Predicated region
        $region109: #{simsiam_forward.2} parent=103 // pred_check
          %p684 = pneg %p121
        $region110: #{simsiam_forward.2} parent=103 // pred_check_branch
          %686 = sbr.rel (%p684) target = $region112
        $region111: #{simsiam_forward.2} parent=103 // pred_region
          %688 = dma.done [#allocation5], 2048
        $region112: #{simsiam_forward.2} parent=103 // pred_fallthru
          _
        // Predicated region
        $region113: #{simsiam_forward.2} parent=103 // pred_check
          %p689 = pneg %p289
        $region114: #{simsiam_forward.2} parent=103 // pred_check_branch
          %691 = sbr.rel (%p689) target = $region116
        $region115: #{simsiam_forward.2} parent=103 // pred_region
          %693 = dma.done [#allocation5], 4096
        $region116: #{simsiam_forward.2} parent=103 // pred_fallthru
          _
        // Predicated region
        $region117: #{simsiam_forward.2} parent=103 // pred_check
          %p694 = pneg %p373
        $region118: #{simsiam_forward.2} parent=103 // pred_check_branch
          %696 = sbr.rel (%p694) target = $region120
        $region119: #{simsiam_forward.2} parent=103 // pred_region
          %698 = dma.done [#allocation8], 2048
        $region120: #{simsiam_forward.2} parent=103 // pred_fallthru
          _
        // Predicated region
        $region121: #{simsiam_forward.2} parent=103 // pred_check
          %p699 = pneg %p457
        $region122: #{simsiam_forward.2} parent=103 // pred_check_branch
          %701 = sbr.rel (%p699) target = $region124
        $region123: #{simsiam_forward.2} parent=103 // pred_region
          %703 = dma.done [#allocation8], 2048
        $region124: #{simsiam_forward.2} parent=103 // pred_fallthru
          _
        %p704 = scmp.lt.s32.totalorder %s37, 1
        %s705 = scalar_select %p704, %s37, 1
        %s706 = smul.addr %s705, 2
        %s707 = smul.addr %s706, 8
        %s708 = scalar_lea.vmem %s0, %s707
        %p709 = pneg %p58
        %p710 = pneg %p55
        %p711 = pneg %p79
        %p712 = pneg %p76
        %p713 = pneg %p100
        %p714 = pneg %p97
        %p715 = pneg %p121
        %p716 = pneg %p118
        %p717 = pneg %p142
        %p718 = pneg %p139
        %p719 = pneg %p163
        %p720 = pneg %p160
        %p721 = pneg %p184
        %p722 = pneg %p181
        %p723 = pneg %p205
        %p724 = pneg %p202
        %p725 = pneg %p226
        %p726 = pneg %p223
        %p727 = pneg %p247
        %p728 = pneg %p244
        %p729 = pneg %p268
        %p730 = pneg %p265
        %p731 = pneg %p289
        %p732 = pneg %p286
        %p733 = pneg %p310
        %p734 = pneg %p307
        %p735 = pneg %p331
        %p736 = pneg %p328
        %p737 = pneg %p352
        %p738 = pneg %p349
        %p739 = pneg %p373
        %p740 = pneg %p370
        %p741 = pneg %p394
        %p742 = pneg %p391
        %p743 = pneg %p415
        %p744 = pneg %p412
        %p745 = pneg %p436
        %p746 = pneg %p433
        %p747 = pneg %p457
        %p748 = pneg %p454
        %p749 = pneg %p478
        %p750 = pneg %p475
        %p751 = pneg %p504
        %p752 = pneg %p501
        %p753 = scmp.lt.s32.totalorder %s37, 1
        %s754 = scalar_select %p753, %s37, 1
        %s755 = smul.addr %s754, 2
        %s756 = smul.addr %s755, 8
        %s757 = scalar_lea.vmem %s21, %s756
        %p758 = pneg %p530
        %p759 = pneg %p527
        %p760 = scmp.lt.s32.totalorder %s37, 1
        %s761 = scalar_select %p760, %s37, 1
        %s762 = smul.addr %s761, 2
        %s763 = smul.addr %s762, 8
        %s764 = scalar_lea.vmem %s22, %s763
        %p765 = scmp.lt.s32.totalorder %s37, 1
        %s766 = scalar_select %p765, %s37, 1
        %s767 = smul.addr %s766, 2
        %s768 = smul.addr %s767, 8
        %s769 = scalar_lea.vmem %s0, %s768
        %p770 = scmp.lt.s32.totalorder %s37, 1
        %s771 = scalar_select %p770, %s37, 1
        %s772 = smul.addr %s771, 2
        %s773 = smul.addr %s772, 8
        %s774 = scalar_lea.vmem %s21, %s773
        %p775 = scmp.lt.s32.totalorder %s37, 1
        %s776 = scalar_select %p775, %s37, 1
        %s777 = smul.addr %s776, 2
        %s778 = smul.addr %s777, 8
        %s779 = scalar_lea.vmem %s22, %s778
        %v780 = vld [vmem:[%s769] sm:$0xff]
        %v781 = vld [vmem:[%s769 + $0x8] sm:$0xff]
        %v782 = vpack.c.bf16 %v780, %v780
        %v783 = vpack.c.bf16 %v781, %v781
        %v784 = vld [vmem:[#allocation2] sm:$0xf]
        %v785 = vld [vmem:[#allocation2 + $0x4] sm:$0xf]
        %v786 = vld [vmem:[#allocation2 + $0x8] sm:$0xf]
        %v787 = vld [vmem:[#allocation2 + $0xc] sm:$0xf]
        %v788 = vld [vmem:[#allocation2 + $0x10] sm:$0xf]
        %v789 = vld [vmem:[#allocation2 + $0x14] sm:$0xf]
        %v790 = vld [vmem:[#allocation2 + $0x18] sm:$0xf]
        %v791 = vld [vmem:[#allocation2 + $0x1c] sm:$0xf]
        %v792 = vld [vmem:[#allocation2 + $0x20] sm:$0xf]
        %v793 = vld [vmem:[#allocation2 + $0x24] sm:$0xf]
        %v794 = vld [vmem:[#allocation2 + $0x28] sm:$0xf]
        %v795 = vld [vmem:[#allocation2 + $0x2c] sm:$0xf]
        %v796 = vld [vmem:[#allocation2 + $0x30] sm:$0xf]
        %v797 = vld [vmem:[#allocation2 + $0x34] sm:$0xf]
        %v798 = vld [vmem:[#allocation2 + $0x38] sm:$0xf]
        %v799 = vld [vmem:[#allocation2 + $0x3c] sm:$0xf]
        %v800 = vld [vmem:[#allocation2 + $0x40] sm:$0xf]
        %v801 = vld [vmem:[#allocation2 + $0x44] sm:$0xf]
        %v802 = vld [vmem:[#allocation2 + $0x48] sm:$0xf]
        %v803 = vld [vmem:[#allocation2 + $0x4c] sm:$0xf]
        %v804 = vld [vmem:[#allocation2 + $0x50] sm:$0xf]
        %v805 = vld [vmem:[#allocation2 + $0x54] sm:$0xf]
        %v806 = vld [vmem:[#allocation2 + $0x58] sm:$0xf]
        %v807 = vld [vmem:[#allocation2 + $0x5c] sm:$0xf]
        %v808 = vld [vmem:[#allocation2 + $0x60] sm:$0xf]
        %v809 = vld [vmem:[#allocation2 + $0x64] sm:$0xf]
        %v810 = vld [vmem:[#allocation2 + $0x68] sm:$0xf]
        %v811 = vld [vmem:[#allocation2 + $0x6c] sm:$0xf]
        %v812 = vld [vmem:[#allocation2 + $0x70] sm:$0xf]
        %v813 = vld [vmem:[#allocation2 + $0x74] sm:$0xf]
        %v814 = vld [vmem:[#allocation2 + $0x78] sm:$0xf]
        %v815 = vld [vmem:[#allocation2 + $0x7c] sm:$0xf]
        %v816 = vld [vmem:[%s2] sm:$0x1]
        %v818 = vperm.slane %v816, 0
        %v852 = vunpack.c.l.b16 %v784
        %v853 = vunpack.c.l.b16 %v785
        %v854 = vunpack.c.l.b16 %v786
        %v855 = vunpack.c.l.b16 %v787
        %v856 = vunpack.c.l.b16 %v788
        %v857 = vunpack.c.l.b16 %v789
        %v858 = vunpack.c.l.b16 %v790
        %v859 = vunpack.c.l.b16 %v791
        %v860 = vunpack.c.l.b16 %v792
        %v861 = vunpack.c.l.b16 %v793
        %v862 = vunpack.c.l.b16 %v794
        %v863 = vunpack.c.l.b16 %v795
        %v864 = vunpack.c.l.b16 %v796
        %v865 = vunpack.c.l.b16 %v797
        %v866 = vunpack.c.l.b16 %v798
        %v867 = vunpack.c.l.b16 %v799
        %v868 = vunpack.c.l.b16 %v800
        %v869 = vunpack.c.l.b16 %v801
        %v870 = vunpack.c.l.b16 %v802
        %v871 = vunpack.c.l.b16 %v803
        %v872 = vunpack.c.l.b16 %v804
        %v873 = vunpack.c.l.b16 %v805
        %v874 = vunpack.c.l.b16 %v806
        %v875 = vunpack.c.l.b16 %v807
        %v876 = vunpack.c.l.b16 %v808
        %v877 = vunpack.c.l.b16 %v809
        %v878 = vunpack.c.l.b16 %v810
        %v879 = vunpack.c.l.b16 %v811
        %v880 = vunpack.c.l.b16 %v812
        %v881 = vunpack.c.l.b16 %v813
        %v882 = vunpack.c.l.b16 %v814
        %v883 = vunpack.c.l.b16 %v815
        %v884 = vpack.c.b16 %v853, %v852
        %v885 = vpack.c.b16 %v855, %v854
        %v886 = vpack.c.b16 %v857, %v856
        %v887 = vpack.c.b16 %v859, %v858
        %v888 = vpack.c.b16 %v861, %v860
        %v889 = vpack.c.b16 %v863, %v862
        %v890 = vpack.c.b16 %v865, %v864
        %v891 = vpack.c.b16 %v867, %v866
        %v892 = vpack.c.b16 %v869, %v868
        %v893 = vpack.c.b16 %v871, %v870
        %v894 = vpack.c.b16 %v873, %v872
        %v895 = vpack.c.b16 %v875, %v874
        %v896 = vpack.c.b16 %v877, %v876
        %v897 = vpack.c.b16 %v879, %v878
        %v898 = vpack.c.b16 %v881, %v880
        %v899 = vpack.c.b16 %v883, %v882
        %916 = vmatpush.bf16.msra.mxu0 %v891
        %917 = vmatpush.bf16.msra.mxu0 %v890
        %918 = vmatpush.bf16.msra.mxu0 %v889
        %919 = vmatpush.bf16.msra.mxu0 %v888
        %920 = vmatpush.bf16.msra.mxu0 %v887
        %921 = vmatpush.bf16.msra.mxu0 %v886
        %922 = vmatpush.bf16.msra.mxu0 %v885
        %923 = vmatpush.bf16.msra.mxu0 %v884
        %924 = vmatmul.bf16.gmra.mxu0 %v782
        %v925 = vpop.f32.mrf.mxu0
        %v926 = vadd.f32 %v818, %v925
        %v927 = vpop.f32.mrf.mxu0
        %928 = vdwg.mxu0
        %929 = vmatpush.bf16.msra.mxu0 %v899
        %930 = vmatpush.bf16.msra.mxu0 %v898
        %931 = vmatpush.bf16.msra.mxu0 %v897
        %932 = vmatpush.bf16.msra.mxu0 %v896
        %933 = vmatpush.bf16.msra.mxu0 %v895
        %934 = vmatpush.bf16.msra.mxu0 %v894
        %935 = vmatpush.bf16.msra.mxu0 %v893
        %936 = vmatpush.bf16.msra.mxu0 %v892
        %937 = vmatmul.bf16.gmra.mxu0 %v783
        %v938 = vpop.f32.mrf.mxu0
        %v939 = vadd.f32 %v926, %v938
        %v940 = vpop.f32.mrf.mxu0
        %941 = vdwg.mxu0
        %v942 = vpack.c.bf16 %v939, %v939
        %v943 = vld [vmem:[#allocation4] sm:$0xff]
        %v944 = vld [vmem:[#allocation4 + $0x8] sm:$0xff]
        %v945 = vld [vmem:[#allocation4 + $0x10] sm:$0xff]
        %v946 = vld [vmem:[#allocation4 + $0x18] sm:$0xff]
        %v947 = vld [vmem:[#allocation4 + $0x20] sm:$0xff]
        %v948 = vld [vmem:[#allocation4 + $0x28] sm:$0xff]
        %v949 = vld [vmem:[#allocation4 + $0x30] sm:$0xff]
        %v950 = vld [vmem:[#allocation4 + $0x38] sm:$0xff]
        %v951 = vld [vmem:[#allocation4 + $0x40] sm:$0xff]
        %v952 = vld [vmem:[#allocation4 + $0x48] sm:$0xff]
        %v953 = vld [vmem:[#allocation4 + $0x50] sm:$0xff]
        %v954 = vld [vmem:[#allocation4 + $0x58] sm:$0xff]
        %v955 = vld [vmem:[#allocation4 + $0x60] sm:$0xff]
        %v956 = vld [vmem:[#allocation4 + $0x68] sm:$0xff]
        %v957 = vld [vmem:[#allocation4 + $0x70] sm:$0xff]
        %v958 = vld [vmem:[#allocation4 + $0x78] sm:$0xff]
        %v959 = vld [vmem:[%s4] sm:$0x3]
        %v961 = vperm.slane %v959, 0
        %v962 = vperm.slane %v959, 1
        %v981 = vunpack.c.l.b16 %v943
        %v982 = vunpack.c.h.b16 %v943
        %v983 = vunpack.c.l.b16 %v944
        %v984 = vunpack.c.h.b16 %v944
        %v985 = vunpack.c.l.b16 %v945
        %v986 = vunpack.c.h.b16 %v945
        %v987 = vunpack.c.l.b16 %v946
        %v988 = vunpack.c.h.b16 %v946
        %v989 = vunpack.c.l.b16 %v947
        %v990 = vunpack.c.h.b16 %v947
        %v991 = vunpack.c.l.b16 %v948
        %v992 = vunpack.c.h.b16 %v948
        %v993 = vunpack.c.l.b16 %v949
        %v994 = vunpack.c.h.b16 %v949
        %v995 = vunpack.c.l.b16 %v950
        %v996 = vunpack.c.h.b16 %v950
        %v997 = vunpack.c.l.b16 %v951
        %v998 = vunpack.c.h.b16 %v951
        %v999 = vunpack.c.l.b16 %v952
        %v1000 = vunpack.c.h.b16 %v952
        %v1001 = vunpack.c.l.b16 %v953
        %v1002 = vunpack.c.h.b16 %v953
        %v1003 = vunpack.c.l.b16 %v954
        %v1004 = vunpack.c.h.b16 %v954
        %v1005 = vunpack.c.l.b16 %v955
        %v1006 = vunpack.c.h.b16 %v955
        %v1007 = vunpack.c.l.b16 %v956
        %v1008 = vunpack.c.h.b16 %v956
        %v1009 = vunpack.c.l.b16 %v957
        %v1010 = vunpack.c.h.b16 %v957
        %v1011 = vunpack.c.l.b16 %v958
        %v1012 = vunpack.c.h.b16 %v958
        %v1013 = vpack.c.b16 %v983, %v981
        %v1014 = vpack.c.b16 %v984, %v982
        %v1015 = vpack.c.b16 %v987, %v985
        %v1016 = vpack.c.b16 %v988, %v986
        %v1017 = vpack.c.b16 %v991, %v989
        %v1018 = vpack.c.b16 %v992, %v990
        %v1019 = vpack.c.b16 %v995, %v993
        %v1020 = vpack.c.b16 %v996, %v994
        %v1021 = vpack.c.b16 %v999, %v997
        %v1022 = vpack.c.b16 %v1000, %v998
        %v1023 = vpack.c.b16 %v1003, %v1001
        %v1024 = vpack.c.b16 %v1004, %v1002
        %v1025 = vpack.c.b16 %v1007, %v1005
        %v1026 = vpack.c.b16 %v1008, %v1006
        %v1027 = vpack.c.b16 %v1011, %v1009
        %v1028 = vpack.c.b16 %v1012, %v1010
        %1045 = vmatpush.bf16.msra.mxu0 %v1027
        %1046 = vmatpush.bf16.msra.mxu0 %v1025
        %1047 = vmatpush.bf16.msra.mxu0 %v1023
        %1048 = vmatpush.bf16.msra.mxu0 %v1021
        %1049 = vmatpush.bf16.msra.mxu0 %v1019
        %1050 = vmatpush.bf16.msra.mxu0 %v1017
        %1051 = vmatpush.bf16.msra.mxu0 %v1015
        %1052 = vmatpush.bf16.msra.mxu0 %v1013
        %1053 = vmatmul.bf16.gmra.mxu0 %v942
        %v1054 = vpop.f32.mrf.mxu0
        %v1055 = vadd.f32 %v961, %v1054
        %v1056 = vpop.f32.mrf.mxu0
        %1057 = vdwg.mxu0
        %1058 = vmatpush.bf16.msra.mxu0 %v1028
        %1059 = vmatpush.bf16.msra.mxu0 %v1026
        %1060 = vmatpush.bf16.msra.mxu0 %v1024
        %1061 = vmatpush.bf16.msra.mxu0 %v1022
        %1062 = vmatpush.bf16.msra.mxu0 %v1020
        %1063 = vmatpush.bf16.msra.mxu0 %v1018
        %1064 = vmatpush.bf16.msra.mxu0 %v1016
        %1065 = vmatpush.bf16.msra.mxu0 %v1014
        %1066 = vmatmul.bf16.gmra.mxu0 %v942
        %v1067 = vpop.f32.mrf.mxu0
        %v1068 = vadd.f32 %v962, %v1067
        %v1069 = vpop.f32.mrf.mxu0
        %1070 = vdwg.mxu0
        %v1071 = vrot.slane %v1055, 4
        %v1072 = vadd.f32 %v1055, %v1071
        %v1073 = vrot.slane %v1072, 2
        %v1074 = vadd.f32 %v1072, %v1073
        %v1075 = vrot.slane %v1074, 1
        %v1076 = vadd.f32 %v1074, %v1075
        %v1077 = vrot.slane %v1068, 4
        %v1078 = vadd.f32 %v1068, %v1077
        %v1079 = vrot.slane %v1078, 2
        %v1080 = vadd.f32 %v1078, %v1079
        %v1081 = vrot.slane %v1080, 1
        %v1082 = vadd.f32 %v1080, %v1081
        %v1083 = vrcp.pop 8.0
        %v1084 = vmul.f32 8.0, %v1083
        %v1085 = vsub.f32 1.0, %v1084
        %v1086 = vmul.f32 %v1083, %v1085
        %v1087 = vadd.f32 %v1083, %v1086
        %vm1088 = vweird.f32 %v1083
        %v1089 = vsel %vm1088, %v1083, %v1087
        %v1090 = vmul.f32 %v1076, %v1089
        %v1091 = vmul.f32 %v1082, %v1089
        %v1092 = vsub.f32 %v1055, %v1090
        %v1093 = vsub.f32 %v1068, %v1091
        %v1094 = vmul.f32 %v1092, %v1092
        %v1095 = vmul.f32 %v1093, %v1093
        %v1096 = vrot.slane %v1094, 4
        %v1097 = vadd.f32 %v1094, %v1096
        %v1098 = vrot.slane %v1097, 2
        %v1099 = vadd.f32 %v1097, %v1098
        %v1100 = vrot.slane %v1099, 1
        %v1101 = vadd.f32 %v1099, %v1100
        %v1102 = vrot.slane %v1095, 4
        %v1103 = vadd.f32 %v1095, %v1102
        %v1104 = vrot.slane %v1103, 2
        %v1105 = vadd.f32 %v1103, %v1104
        %v1106 = vrot.slane %v1105, 1
        %v1107 = vadd.f32 %v1105, %v1106
        %v1108 = vmul.f32 %v1101, %v1089
        %v1109 = vmul.f32 %v1107, %v1089
        %v1110 = vadd.f32 %v1108, 1e-05
        %v1111 = vadd.f32 %v1109, 1e-05
        %v1112 = vrsqrt.pop %v1110
        %v1113 = vmul.f32 %v1112, %v1110
        %v1114 = vmul.f32 %v1113, %v1112
        %v1115 = vmul.f32 0.5, %v1114
        %v1116 = vsub.f32 1.5, %v1115
        %v1117 = vmul.f32 %v1112, %v1116
        %vm1118 = vweird.f32 %v1110
        %vm1119 = vweird.f32 %v1112
        %vm1120 = vmor %vm1118, %vm1119
        %v1121 = vsel %vm1120, %v1112, %v1117
        %v1122 = vrsqrt.pop %v1111
        %v1123 = vmul.f32 %v1122, %v1111
        %v1124 = vmul.f32 %v1123, %v1122
        %v1125 = vmul.f32 0.5, %v1124
        %v1126 = vsub.f32 1.5, %v1125
        %v1127 = vmul.f32 %v1122, %v1126
        %vm1128 = vweird.f32 %v1111
        %vm1129 = vweird.f32 %v1122
        %vm1130 = vmor %vm1128, %vm1129
        %v1131 = vsel %vm1130, %v1122, %v1127
        %v1132 = vmul.f32 %v1092, %v1121
        %v1133 = vmul.f32 %v1093, %v1131
        %v1134 = vld [vmem:[%s5] sm:$0x3]
        %v1136 = vperm.slane %v1134, 0
        %v1137 = vperm.slane %v1134, 1
        %v1140 = vmul.f32 %v1132, %v1136
        %v1141 = vmul.f32 %v1133, %v1137
        %v1142 = vld [vmem:[%s6] sm:$0x3]
        %v1144 = vperm.slane %v1142, 0
        %v1145 = vperm.slane %v1142, 1
        %v1148 = vadd.f32 %v1140, %v1144
        %v1149 = vadd.f32 %v1141, %v1145
        %v1150 = vmax.f32 %v1148, 0.0
        %v1151 = vmax.f32 %v1149, 0.0
        %v1152 = vpack.c.bf16 %v1150, %v1150
        %v1153 = vpack.c.bf16 %v1151, %v1151
        %v1154 = vld [vmem:[%s7] sm:$0xff]
        %v1155 = vld [vmem:[%s7 + $0x8] sm:$0xff]
        %v1156 = vld [vmem:[%s7 + $0x10] sm:$0xff]
        %v1157 = vld [vmem:[%s7 + $0x18] sm:$0xff]
        %v1158 = vld [vmem:[%s7 + $0x20] sm:$0xff]
        %v1159 = vld [vmem:[%s7 + $0x28] sm:$0xff]
        %v1160 = vld [vmem:[%s7 + $0x30] sm:$0xff]
        %v1161 = vld [vmem:[%s7 + $0x38] sm:$0xff]
        %v1162 = vld [vmem:[%s7 + $0x40] sm:$0xff]
        %v1163 = vld [vmem:[%s7 + $0x48] sm:$0xff]
        %v1164 = vld [vmem:[%s7 + $0x50] sm:$0xff]
        %v1165 = vld [vmem:[%s7 + $0x58] sm:$0xff]
        %v1166 = vld [vmem:[%s7 + $0x60] sm:$0xff]
        %v1167 = vld [vmem:[%s7 + $0x68] sm:$0xff]
        %v1168 = vld [vmem:[%s7 + $0x70] sm:$0xff]
        %v1169 = vld [vmem:[%s7 + $0x78] sm:$0xff]
        %v1170 = vld [vmem:[%s7 + $0x80] sm:$0xff]
        %v1171 = vld [vmem:[%s7 + $0x88] sm:$0xff]
        %v1172 = vld [vmem:[%s7 + $0x90] sm:$0xff]
        %v1173 = vld [vmem:[%s7 + $0x98] sm:$0xff]
        %v1174 = vld [vmem:[%s7 + $0xa0] sm:$0xff]
        %v1175 = vld [vmem:[%s7 + $0xa8] sm:$0xff]
        %v1176 = vld [vmem:[%s7 + $0xb0] sm:$0xff]
        %v1177 = vld [vmem:[%s7 + $0xb8] sm:$0xff]
        %v1178 = vld [vmem:[%s7 + $0xc0] sm:$0xff]
        %v1179 = vld [vmem:[%s7 + $0xc8] sm:$0xff]
        %v1180 = vld [vmem:[%s7 + $0xd0] sm:$0xff]
        %v1181 = vld [vmem:[%s7 + $0xd8] sm:$0xff]
        %v1182 = vld [vmem:[%s7 + $0xe0] sm:$0xff]
        %v1183 = vld [vmem:[%s7 + $0xe8] sm:$0xff]
        %v1184 = vld [vmem:[%s7 + $0xf0] sm:$0xff]
        %v1185 = vld [vmem:[%s7 + $0xf8] sm:$0xff]
        %v1186 = vld [vmem:[%s8] sm:$0x3]
        %v1188 = vperm.slane %v1186, 0
        %v1189 = vperm.slane %v1186, 1
        %v1224 = vunpack.c.l.b16 %v1154
        %v1225 = vunpack.c.h.b16 %v1154
        %v1226 = vunpack.c.l.b16 %v1155
        %v1227 = vunpack.c.h.b16 %v1155
        %v1228 = vunpack.c.l.b16 %v1156
        %v1229 = vunpack.c.h.b16 %v1156
        %v1230 = vunpack.c.l.b16 %v1157
        %v1231 = vunpack.c.h.b16 %v1157
        %v1232 = vunpack.c.l.b16 %v1158
        %v1233 = vunpack.c.h.b16 %v1158
        %v1234 = vunpack.c.l.b16 %v1159
        %v1235 = vunpack.c.h.b16 %v1159
        %v1236 = vunpack.c.l.b16 %v1160
        %v1237 = vunpack.c.h.b16 %v1160
        %v1238 = vunpack.c.l.b16 %v1161
        %v1239 = vunpack.c.h.b16 %v1161
        %v1240 = vunpack.c.l.b16 %v1162
        %v1241 = vunpack.c.h.b16 %v1162
        %v1242 = vunpack.c.l.b16 %v1163
        %v1243 = vunpack.c.h.b16 %v1163
        %v1244 = vunpack.c.l.b16 %v1164
        %v1245 = vunpack.c.h.b16 %v1164
        %v1246 = vunpack.c.l.b16 %v1165
        %v1247 = vunpack.c.h.b16 %v1165
        %v1248 = vunpack.c.l.b16 %v1166
        %v1249 = vunpack.c.h.b16 %v1166
        %v1250 = vunpack.c.l.b16 %v1167
        %v1251 = vunpack.c.h.b16 %v1167
        %v1252 = vunpack.c.l.b16 %v1168
        %v1253 = vunpack.c.h.b16 %v1168
        %v1254 = vunpack.c.l.b16 %v1169
        %v1255 = vunpack.c.h.b16 %v1169
        %v1256 = vunpack.c.l.b16 %v1170
        %v1257 = vunpack.c.h.b16 %v1170
        %v1258 = vunpack.c.l.b16 %v1171
        %v1259 = vunpack.c.h.b16 %v1171
        %v1260 = vunpack.c.l.b16 %v1172
        %v1261 = vunpack.c.h.b16 %v1172
        %v1262 = vunpack.c.l.b16 %v1173
        %v1263 = vunpack.c.h.b16 %v1173
        %v1264 = vunpack.c.l.b16 %v1174
        %v1265 = vunpack.c.h.b16 %v1174
        %v1266 = vunpack.c.l.b16 %v1175
        %v1267 = vunpack.c.h.b16 %v1175
        %v1268 = vunpack.c.l.b16 %v1176
        %v1269 = vunpack.c.h.b16 %v1176
        %v1270 = vunpack.c.l.b16 %v1177
        %v1271 = vunpack.c.h.b16 %v1177
        %v1272 = vunpack.c.l.b16 %v1178
        %v1273 = vunpack.c.h.b16 %v1178
        %v1274 = vunpack.c.l.b16 %v1179
        %v1275 = vunpack.c.h.b16 %v1179
        %v1276 = vunpack.c.l.b16 %v1180
        %v1277 = vunpack.c.h.b16 %v1180
        %v1278 = vunpack.c.l.b16 %v1181
        %v1279 = vunpack.c.h.b16 %v1181
        %v1280 = vunpack.c.l.b16 %v1182
        %v1281 = vunpack.c.h.b16 %v1182
        %v1282 = vunpack.c.l.b16 %v1183
        %v1283 = vunpack.c.h.b16 %v1183
        %v1284 = vunpack.c.l.b16 %v1184
        %v1285 = vunpack.c.h.b16 %v1184
        %v1286 = vunpack.c.l.b16 %v1185
        %v1287 = vunpack.c.h.b16 %v1185
        %v1288 = vpack.c.b16 %v1226, %v1224
        %v1289 = vpack.c.b16 %v1227, %v1225
        %v1290 = vpack.c.b16 %v1230, %v1228
        %v1291 = vpack.c.b16 %v1231, %v1229
        %v1292 = vpack.c.b16 %v1234, %v1232
        %v1293 = vpack.c.b16 %v1235, %v1233
        %v1294 = vpack.c.b16 %v1238, %v1236
        %v1295 = vpack.c.b16 %v1239, %v1237
        %v1296 = vpack.c.b16 %v1242, %v1240
        %v1297 = vpack.c.b16 %v1243, %v1241
        %v1298 = vpack.c.b16 %v1246, %v1244
        %v1299 = vpack.c.b16 %v1247, %v1245
        %v1300 = vpack.c.b16 %v1250, %v1248
        %v1301 = vpack.c.b16 %v1251, %v1249
        %v1302 = vpack.c.b16 %v1254, %v1252
        %v1303 = vpack.c.b16 %v1255, %v1253
        %v1304 = vpack.c.b16 %v1258, %v1256
        %v1305 = vpack.c.b16 %v1259, %v1257
        %v1306 = vpack.c.b16 %v1262, %v1260
        %v1307 = vpack.c.b16 %v1263, %v1261
        %v1308 = vpack.c.b16 %v1266, %v1264
        %v1309 = vpack.c.b16 %v1267, %v1265
        %v1310 = vpack.c.b16 %v1270, %v1268
        %v1311 = vpack.c.b16 %v1271, %v1269
        %v1312 = vpack.c.b16 %v1274, %v1272
        %v1313 = vpack.c.b16 %v1275, %v1273
        %v1314 = vpack.c.b16 %v1278, %v1276
        %v1315 = vpack.c.b16 %v1279, %v1277
        %v1316 = vpack.c.b16 %v1282, %v1280
        %v1317 = vpack.c.b16 %v1283, %v1281
        %v1318 = vpack.c.b16 %v1286, %v1284
        %v1319 = vpack.c.b16 %v1287, %v1285
        %1352 = vmatpush.bf16.msra.mxu0 %v1302
        %1353 = vmatpush.bf16.msra.mxu0 %v1300
        %1354 = vmatpush.bf16.msra.mxu0 %v1298
        %1355 = vmatpush.bf16.msra.mxu0 %v1296
        %1356 = vmatpush.bf16.msra.mxu0 %v1294
        %1357 = vmatpush.bf16.msra.mxu0 %v1292
        %1358 = vmatpush.bf16.msra.mxu0 %v1290
        %1359 = vmatpush.bf16.msra.mxu0 %v1288
        %1360 = vmatmul.bf16.gmra.mxu0 %v1152
        %v1361 = vpop.f32.mrf.mxu0
        %v1362 = vadd.f32 %v1188, %v1361
        %v1363 = vpop.f32.mrf.mxu0
        %1364 = vdwg.mxu0
        %1365 = vmatpush.bf16.msra.mxu0 %v1318
        %1366 = vmatpush.bf16.msra.mxu0 %v1316
        %1367 = vmatpush.bf16.msra.mxu0 %v1314
        %1368 = vmatpush.bf16.msra.mxu0 %v1312
        %1369 = vmatpush.bf16.msra.mxu0 %v1310
        %1370 = vmatpush.bf16.msra.mxu0 %v1308
        %1371 = vmatpush.bf16.msra.mxu0 %v1306
        %1372 = vmatpush.bf16.msra.mxu0 %v1304
        %1373 = vmatmul.bf16.gmra.mxu0 %v1153
        %v1374 = vpop.f32.mrf.mxu0
        %v1375 = vadd.f32 %v1362, %v1374
        %v1376 = vpop.f32.mrf.mxu0
        %1377 = vdwg.mxu0
        %1378 = vmatpush.bf16.msra.mxu0 %v1303
        %1379 = vmatpush.bf16.msra.mxu0 %v1301
        %1380 = vmatpush.bf16.msra.mxu0 %v1299
        %1381 = vmatpush.bf16.msra.mxu0 %v1297
        %1382 = vmatpush.bf16.msra.mxu0 %v1295
        %1383 = vmatpush.bf16.msra.mxu0 %v1293
        %1384 = vmatpush.bf16.msra.mxu0 %v1291
        %1385 = vmatpush.bf16.msra.mxu0 %v1289
        %1386 = vmatmul.bf16.gmra.mxu0 %v1152
        %v1387 = vpop.f32.mrf.mxu0
        %v1388 = vadd.f32 %v1189, %v1387
        %v1389 = vpop.f32.mrf.mxu0
        %1390 = vdwg.mxu0
        %1391 = vmatpush.bf16.msra.mxu0 %v1319
        %1392 = vmatpush.bf16.msra.mxu0 %v1317
        %1393 = vmatpush.bf16.msra.mxu0 %v1315
        %1394 = vmatpush.bf16.msra.mxu0 %v1313
        %1395 = vmatpush.bf16.msra.mxu0 %v1311
        %1396 = vmatpush.bf16.msra.mxu0 %v1309
        %1397 = vmatpush.bf16.msra.mxu0 %v1307
        %1398 = vmatpush.bf16.msra.mxu0 %v1305
        %1399 = vmatmul.bf16.gmra.mxu0 %v1153
        %v1400 = vpop.f32.mrf.mxu0
        %v1401 = vadd.f32 %v1388, %v1400
        %v1402 = vpop.f32.mrf.mxu0
        %1403 = vdwg.mxu0
        %v1404 = vrot.slane %v1375, 4
        %v1405 = vadd.f32 %v1375, %v1404
        %v1406 = vrot.slane %v1405, 2
        %v1407 = vadd.f32 %v1405, %v1406
        %v1408 = vrot.slane %v1407, 1
        %v1409 = vadd.f32 %v1407, %v1408
        %v1410 = vrot.slane %v1401, 4
        %v1411 = vadd.f32 %v1401, %v1410
        %v1412 = vrot.slane %v1411, 2
        %v1413 = vadd.f32 %v1411, %v1412
        %v1414 = vrot.slane %v1413, 1
        %v1415 = vadd.f32 %v1413, %v1414
        %v1416 = vmul.f32 %v1409, %v1089
        %v1417 = vmul.f32 %v1415, %v1089
        %v1418 = vsub.f32 %v1375, %v1416
        %v1419 = vsub.f32 %v1401, %v1417
        %v1420 = vmul.f32 %v1418, %v1418
        %v1421 = vmul.f32 %v1419, %v1419
        %v1422 = vrot.slane %v1420, 4
        %v1423 = vadd.f32 %v1420, %v1422
        %v1424 = vrot.slane %v1423, 2
        %v1425 = vadd.f32 %v1423, %v1424
        %v1426 = vrot.slane %v1425, 1
        %v1427 = vadd.f32 %v1425, %v1426
        %v1428 = vrot.slane %v1421, 4
        %v1429 = vadd.f32 %v1421, %v1428
        %v1430 = vrot.slane %v1429, 2
        %v1431 = vadd.f32 %v1429, %v1430
        %v1432 = vrot.slane %v1431, 1
        %v1433 = vadd.f32 %v1431, %v1432
        %v1434 = vmul.f32 %v1427, %v1089
        %v1435 = vmul.f32 %v1433, %v1089
        %v1436 = vadd.f32 %v1434, 1e-05
        %v1437 = vadd.f32 %v1435, 1e-05
        %v1438 = vrsqrt.pop %v1436
        %v1439 = vmul.f32 %v1438, %v1436
        %v1440 = vmul.f32 %v1439, %v1438
        %v1441 = vmul.f32 0.5, %v1440
        %v1442 = vsub.f32 1.5, %v1441
        %v1443 = vmul.f32 %v1438, %v1442
        %vm1444 = vweird.f32 %v1436
        %vm1445 = vweird.f32 %v1438
        %vm1446 = vmor %vm1444, %vm1445
        %v1447 = vsel %vm1446, %v1438, %v1443
        %v1448 = vrsqrt.pop %v1437
        %v1449 = vmul.f32 %v1448, %v1437
        %v1450 = vmul.f32 %v1449, %v1448
        %v1451 = vmul.f32 0.5, %v1450
        %v1452 = vsub.f32 1.5, %v1451
        %v1453 = vmul.f32 %v1448, %v1452
        %vm1454 = vweird.f32 %v1437
        %vm1455 = vweird.f32 %v1448
        %vm1456 = vmor %vm1454, %vm1455
        %v1457 = vsel %vm1456, %v1448, %v1453
        %v1458 = vmul.f32 %v1418, %v1447
        %v1459 = vmul.f32 %v1419, %v1457
        %v1460 = vld [vmem:[%s9] sm:$0x3]
        %v1462 = vperm.slane %v1460, 0
        %v1463 = vperm.slane %v1460, 1
        %v1466 = vmul.f32 %v1458, %v1462
        %v1467 = vmul.f32 %v1459, %v1463
        %v1468 = vld [vmem:[%s10] sm:$0x3]
        %v1470 = vperm.slane %v1468, 0
        %v1471 = vperm.slane %v1468, 1
        %v1474 = vadd.f32 %v1466, %v1470
        %v1475 = vadd.f32 %v1467, %v1471
        %v1476 = vmax.f32 %v1474, 0.0
        %v1477 = vmax.f32 %v1475, 0.0
        %v1478 = vpack.c.bf16 %v1476, %v1476
        %v1479 = vpack.c.bf16 %v1477, %v1477
        %v1480 = vld [vmem:[#allocation6] sm:$0xff]
        %v1481 = vld [vmem:[#allocation6 + $0x8] sm:$0xff]
        %v1482 = vld [vmem:[#allocation6 + $0x10] sm:$0xff]
        %v1483 = vld [vmem:[#allocation6 + $0x18] sm:$0xff]
        %v1484 = vld [vmem:[#allocation6 + $0x20] sm:$0xff]
        %v1485 = vld [vmem:[#allocation6 + $0x28] sm:$0xff]
        %v1486 = vld [vmem:[#allocation6 + $0x30] sm:$0xff]
        %v1487 = vld [vmem:[#allocation6 + $0x38] sm:$0xff]
        %v1488 = vld [vmem:[#allocation6 + $0x40] sm:$0xff]
        %v1489 = vld [vmem:[#allocation6 + $0x48] sm:$0xff]
        %v1490 = vld [vmem:[#allocation6 + $0x50] sm:$0xff]
        %v1491 = vld [vmem:[#allocation6 + $0x58] sm:$0xff]
        %v1492 = vld [vmem:[#allocation6 + $0x60] sm:$0xff]
        %v1493 = vld [vmem:[#allocation6 + $0x68] sm:$0xff]
        %v1494 = vld [vmem:[#allocation6 + $0x70] sm:$0xff]
        %v1495 = vld [vmem:[#allocation6 + $0x78] sm:$0xff]
        %v1496 = vld [vmem:[#allocation6 + $0x80] sm:$0xff]
        %v1497 = vld [vmem:[#allocation6 + $0x88] sm:$0xff]
        %v1498 = vld [vmem:[#allocation6 + $0x90] sm:$0xff]
        %v1499 = vld [vmem:[#allocation6 + $0x98] sm:$0xff]
        %v1500 = vld [vmem:[#allocation6 + $0xa0] sm:$0xff]
        %v1501 = vld [vmem:[#allocation6 + $0xa8] sm:$0xff]
        %v1502 = vld [vmem:[#allocation6 + $0xb0] sm:$0xff]
        %v1503 = vld [vmem:[#allocation6 + $0xb8] sm:$0xff]
        %v1504 = vld [vmem:[#allocation6 + $0xc0] sm:$0xff]
        %v1505 = vld [vmem:[#allocation6 + $0xc8] sm:$0xff]
        %v1506 = vld [vmem:[#allocation6 + $0xd0] sm:$0xff]
        %v1507 = vld [vmem:[#allocation6 + $0xd8] sm:$0xff]
        %v1508 = vld [vmem:[#allocation6 + $0xe0] sm:$0xff]
        %v1509 = vld [vmem:[#allocation6 + $0xe8] sm:$0xff]
        %v1510 = vld [vmem:[#allocation6 + $0xf0] sm:$0xff]
        %v1511 = vld [vmem:[#allocation6 + $0xf8] sm:$0xff]
        %v1512 = vld [vmem:[%s12] sm:$0x3]
        %v1514 = vperm.slane %v1512, 0
        %v1515 = vperm.slane %v1512, 1
        %v1550 = vunpack.c.l.b16 %v1480
        %v1551 = vunpack.c.h.b16 %v1480
        %v1552 = vunpack.c.l.b16 %v1481
        %v1553 = vunpack.c.h.b16 %v1481
        %v1554 = vunpack.c.l.b16 %v1482
        %v1555 = vunpack.c.h.b16 %v1482
        %v1556 = vunpack.c.l.b16 %v1483
        %v1557 = vunpack.c.h.b16 %v1483
        %v1558 = vunpack.c.l.b16 %v1484
        %v1559 = vunpack.c.h.b16 %v1484
        %v1560 = vunpack.c.l.b16 %v1485
        %v1561 = vunpack.c.h.b16 %v1485
        %v1562 = vunpack.c.l.b16 %v1486
        %v1563 = vunpack.c.h.b16 %v1486
        %v1564 = vunpack.c.l.b16 %v1487
        %v1565 = vunpack.c.h.b16 %v1487
        %v1566 = vunpack.c.l.b16 %v1488
        %v1567 = vunpack.c.h.b16 %v1488
        %v1568 = vunpack.c.l.b16 %v1489
        %v1569 = vunpack.c.h.b16 %v1489
        %v1570 = vunpack.c.l.b16 %v1490
        %v1571 = vunpack.c.h.b16 %v1490
        %v1572 = vunpack.c.l.b16 %v1491
        %v1573 = vunpack.c.h.b16 %v1491
        %v1574 = vunpack.c.l.b16 %v1492
        %v1575 = vunpack.c.h.b16 %v1492
        %v1576 = vunpack.c.l.b16 %v1493
        %v1577 = vunpack.c.h.b16 %v1493
        %v1578 = vunpack.c.l.b16 %v1494
        %v1579 = vunpack.c.h.b16 %v1494
        %v1580 = vunpack.c.l.b16 %v1495
        %v1581 = vunpack.c.h.b16 %v1495
        %v1582 = vunpack.c.l.b16 %v1496
        %v1583 = vunpack.c.h.b16 %v1496
        %v1584 = vunpack.c.l.b16 %v1497
        %v1585 = vunpack.c.h.b16 %v1497
        %v1586 = vunpack.c.l.b16 %v1498
        %v1587 = vunpack.c.h.b16 %v1498
        %v1588 = vunpack.c.l.b16 %v1499
        %v1589 = vunpack.c.h.b16 %v1499
        %v1590 = vunpack.c.l.b16 %v1500
        %v1591 = vunpack.c.h.b16 %v1500
        %v1592 = vunpack.c.l.b16 %v1501
        %v1593 = vunpack.c.h.b16 %v1501
        %v1594 = vunpack.c.l.b16 %v1502
        %v1595 = vunpack.c.h.b16 %v1502
        %v1596 = vunpack.c.l.b16 %v1503
        %v1597 = vunpack.c.h.b16 %v1503
        %v1598 = vunpack.c.l.b16 %v1504
        %v1599 = vunpack.c.h.b16 %v1504
        %v1600 = vunpack.c.l.b16 %v1505
        %v1601 = vunpack.c.h.b16 %v1505
        %v1602 = vunpack.c.l.b16 %v1506
        %v1603 = vunpack.c.h.b16 %v1506
        %v1604 = vunpack.c.l.b16 %v1507
        %v1605 = vunpack.c.h.b16 %v1507
        %v1606 = vunpack.c.l.b16 %v1508
        %v1607 = vunpack.c.h.b16 %v1508
        %v1608 = vunpack.c.l.b16 %v1509
        %v1609 = vunpack.c.h.b16 %v1509
        %v1610 = vunpack.c.l.b16 %v1510
        %v1611 = vunpack.c.h.b16 %v1510
        %v1612 = vunpack.c.l.b16 %v1511
        %v1613 = vunpack.c.h.b16 %v1511
        %v1614 = vpack.c.b16 %v1552, %v1550
        %v1615 = vpack.c.b16 %v1553, %v1551
        %v1616 = vpack.c.b16 %v1556, %v1554
        %v1617 = vpack.c.b16 %v1557, %v1555
        %v1618 = vpack.c.b16 %v1560, %v1558
        %v1619 = vpack.c.b16 %v1561, %v1559
        %v1620 = vpack.c.b16 %v1564, %v1562
        %v1621 = vpack.c.b16 %v1565, %v1563
        %v1622 = vpack.c.b16 %v1568, %v1566
        %v1623 = vpack.c.b16 %v1569, %v1567
        %v1624 = vpack.c.b16 %v1572, %v1570
        %v1625 = vpack.c.b16 %v1573, %v1571
        %v1626 = vpack.c.b16 %v1576, %v1574
        %v1627 = vpack.c.b16 %v1577, %v1575
        %v1628 = vpack.c.b16 %v1580, %v1578
        %v1629 = vpack.c.b16 %v1581, %v1579
        %v1630 = vpack.c.b16 %v1584, %v1582
        %v1631 = vpack.c.b16 %v1585, %v1583
        %v1632 = vpack.c.b16 %v1588, %v1586
        %v1633 = vpack.c.b16 %v1589, %v1587
        %v1634 = vpack.c.b16 %v1592, %v1590
        %v1635 = vpack.c.b16 %v1593, %v1591
        %v1636 = vpack.c.b16 %v1596, %v1594
        %v1637 = vpack.c.b16 %v1597, %v1595
        %v1638 = vpack.c.b16 %v1600, %v1598
        %v1639 = vpack.c.b16 %v1601, %v1599
        %v1640 = vpack.c.b16 %v1604, %v1602
        %v1641 = vpack.c.b16 %v1605, %v1603
        %v1642 = vpack.c.b16 %v1608, %v1606
        %v1643 = vpack.c.b16 %v1609, %v1607
        %v1644 = vpack.c.b16 %v1612, %v1610
        %v1645 = vpack.c.b16 %v1613, %v1611
        %1678 = vmatpush.bf16.msra.mxu0 %v1628
        %1679 = vmatpush.bf16.msra.mxu0 %v1626
        %1680 = vmatpush.bf16.msra.mxu0 %v1624
        %1681 = vmatpush.bf16.msra.mxu0 %v1622
        %1682 = vmatpush.bf16.msra.mxu0 %v1620
        %1683 = vmatpush.bf16.msra.mxu0 %v1618
        %1684 = vmatpush.bf16.msra.mxu0 %v1616
        %1685 = vmatpush.bf16.msra.mxu0 %v1614
        %1686 = vmatmul.bf16.gmra.mxu0 %v1478
        %v1687 = vpop.f32.mrf.mxu0
        %v1688 = vadd.f32 %v1514, %v1687
        %v1689 = vpop.f32.mrf.mxu0
        %1690 = vdwg.mxu0
        %1691 = vmatpush.bf16.msra.mxu0 %v1644
        %1692 = vmatpush.bf16.msra.mxu0 %v1642
        %1693 = vmatpush.bf16.msra.mxu0 %v1640
        %1694 = vmatpush.bf16.msra.mxu0 %v1638
        %1695 = vmatpush.bf16.msra.mxu0 %v1636
        %1696 = vmatpush.bf16.msra.mxu0 %v1634
        %1697 = vmatpush.bf16.msra.mxu0 %v1632
        %1698 = vmatpush.bf16.msra.mxu0 %v1630
        %1699 = vmatmul.bf16.gmra.mxu0 %v1479
        %v1700 = vpop.f32.mrf.mxu0
        %v1701 = vadd.f32 %v1688, %v1700
        %v1702 = vpop.f32.mrf.mxu0
        %1703 = vdwg.mxu0
        %1704 = vmatpush.bf16.msra.mxu0 %v1629
        %1705 = vmatpush.bf16.msra.mxu0 %v1627
        %1706 = vmatpush.bf16.msra.mxu0 %v1625
        %1707 = vmatpush.bf16.msra.mxu0 %v1623
        %1708 = vmatpush.bf16.msra.mxu0 %v1621
        %1709 = vmatpush.bf16.msra.mxu0 %v1619
        %1710 = vmatpush.bf16.msra.mxu0 %v1617
        %1711 = vmatpush.bf16.msra.mxu0 %v1615
        %1712 = vmatmul.bf16.gmra.mxu0 %v1478
        %v1713 = vpop.f32.mrf.mxu0
        %v1714 = vadd.f32 %v1515, %v1713
        %v1715 = vpop.f32.mrf.mxu0
        %1716 = vdwg.mxu0
        %1717 = vmatpush.bf16.msra.mxu0 %v1645
        %1718 = vmatpush.bf16.msra.mxu0 %v1643
        %1719 = vmatpush.bf16.msra.mxu0 %v1641
        %1720 = vmatpush.bf16.msra.mxu0 %v1639
        %1721 = vmatpush.bf16.msra.mxu0 %v1637
        %1722 = vmatpush.bf16.msra.mxu0 %v1635
        %1723 = vmatpush.bf16.msra.mxu0 %v1633
        %1724 = vmatpush.bf16.msra.mxu0 %v1631
        %1725 = vmatmul.bf16.gmra.mxu0 %v1479
        %v1726 = vpop.f32.mrf.mxu0
        %v1727 = vadd.f32 %v1714, %v1726
        %v1728 = vpop.f32.mrf.mxu0
        %1729 = vdwg.mxu0
        %v1730 = vrot.slane %v1701, 4
        %v1731 = vadd.f32 %v1701, %v1730
        %v1732 = vrot.slane %v1731, 2
        %v1733 = vadd.f32 %v1731, %v1732
        %v1734 = vrot.slane %v1733, 1
        %v1735 = vadd.f32 %v1733, %v1734
        %v1736 = vrot.slane %v1727, 4
        %v1737 = vadd.f32 %v1727, %v1736
        %v1738 = vrot.slane %v1737, 2
        %v1739 = vadd.f32 %v1737, %v1738
        %v1740 = vrot.slane %v1739, 1
        %v1741 = vadd.f32 %v1739, %v1740
        %v1742 = vmul.f32 %v1735, %v1089
        %v1743 = vmul.f32 %v1741, %v1089
        %v1744 = vsub.f32 %v1701, %v1742
        %v1745 = vsub.f32 %v1727, %v1743
        %v1746 = vmul.f32 %v1744, %v1744
        %v1747 = vmul.f32 %v1745, %v1745
        %v1748 = vrot.slane %v1746, 4
        %v1749 = vadd.f32 %v1746, %v1748
        %v1750 = vrot.slane %v1749, 2
        %v1751 = vadd.f32 %v1749, %v1750
        %v1752 = vrot.slane %v1751, 1
        %v1753 = vadd.f32 %v1751, %v1752
        %v1754 = vrot.slane %v1747, 4
        %v1755 = vadd.f32 %v1747, %v1754
        %v1756 = vrot.slane %v1755, 2
        %v1757 = vadd.f32 %v1755, %v1756
        %v1758 = vrot.slane %v1757, 1
        %v1759 = vadd.f32 %v1757, %v1758
        %v1760 = vmul.f32 %v1753, %v1089
        %v1761 = vmul.f32 %v1759, %v1089
        %v1762 = vadd.f32 %v1760, 1e-05
        %v1763 = vadd.f32 %v1761, 1e-05
        %v1764 = vrsqrt.pop %v1762
        %v1765 = vmul.f32 %v1764, %v1762
        %v1766 = vmul.f32 %v1765, %v1764
        %v1767 = vmul.f32 0.5, %v1766
        %v1768 = vsub.f32 1.5, %v1767
        %v1769 = vmul.f32 %v1764, %v1768
        %vm1770 = vweird.f32 %v1762
        %vm1771 = vweird.f32 %v1764
        %vm1772 = vmor %vm1770, %vm1771
        %v1773 = vsel %vm1772, %v1764, %v1769
        %v1774 = vrsqrt.pop %v1763
        %v1775 = vmul.f32 %v1774, %v1763
        %v1776 = vmul.f32 %v1775, %v1774
        %v1777 = vmul.f32 0.5, %v1776
        %v1778 = vsub.f32 1.5, %v1777
        %v1779 = vmul.f32 %v1774, %v1778
        %vm1780 = vweird.f32 %v1763
        %vm1781 = vweird.f32 %v1774
        %vm1782 = vmor %vm1780, %vm1781
        %v1783 = vsel %vm1782, %v1774, %v1779
        %v1784 = vmul.f32 %v1744, %v1773
        %v1785 = vmul.f32 %v1745, %v1783
        %v1786 = vld [vmem:[%s13] sm:$0x3]
        %v1788 = vperm.slane %v1786, 0
        %v1789 = vperm.slane %v1786, 1
        %v1792 = vmul.f32 %v1784, %v1788
        %v1793 = vmul.f32 %v1785, %v1789
        %v1794 = vld [vmem:[%s14] sm:$0x3]
        %v1796 = vperm.slane %v1794, 0
        %v1797 = vperm.slane %v1794, 1
        %v1800 = vadd.f32 %v1792, %v1796
        %v1801 = vadd.f32 %v1793, %v1797
        %v1802 = vpack.c.bf16 %v1800, %v1800
        %v1803 = vpack.c.bf16 %v1801, %v1801
        %v1804 = vld [vmem:[#allocation7] sm:$0xf]
        %v1805 = vld [vmem:[#allocation7 + $0x4] sm:$0xf]
        %v1806 = vld [vmem:[#allocation7 + $0x8] sm:$0xf]
        %v1807 = vld [vmem:[#allocation7 + $0xc] sm:$0xf]
        %v1808 = vld [vmem:[#allocation7 + $0x10] sm:$0xf]
        %v1809 = vld [vmem:[#allocation7 + $0x14] sm:$0xf]
        %v1810 = vld [vmem:[#allocation7 + $0x18] sm:$0xf]
        %v1811 = vld [vmem:[#allocation7 + $0x1c] sm:$0xf]
        %v1812 = vld [vmem:[#allocation7 + $0x20] sm:$0xf]
        %v1813 = vld [vmem:[#allocation7 + $0x24] sm:$0xf]
        %v1814 = vld [vmem:[#allocation7 + $0x28] sm:$0xf]
        %v1815 = vld [vmem:[#allocation7 + $0x2c] sm:$0xf]
        %v1816 = vld [vmem:[#allocation7 + $0x30] sm:$0xf]
        %v1817 = vld [vmem:[#allocation7 + $0x34] sm:$0xf]
        %v1818 = vld [vmem:[#allocation7 + $0x38] sm:$0xf]
        %v1819 = vld [vmem:[#allocation7 + $0x3c] sm:$0xf]
        %v1820 = vld [vmem:[#allocation7 + $0x40] sm:$0xf]
        %v1821 = vld [vmem:[#allocation7 + $0x44] sm:$0xf]
        %v1822 = vld [vmem:[#allocation7 + $0x48] sm:$0xf]
        %v1823 = vld [vmem:[#allocation7 + $0x4c] sm:$0xf]
        %v1824 = vld [vmem:[#allocation7 + $0x50] sm:$0xf]
        %v1825 = vld [vmem:[#allocation7 + $0x54] sm:$0xf]
        %v1826 = vld [vmem:[#allocation7 + $0x58] sm:$0xf]
        %v1827 = vld [vmem:[#allocation7 + $0x5c] sm:$0xf]
        %v1828 = vld [vmem:[#allocation7 + $0x60] sm:$0xf]
        %v1829 = vld [vmem:[#allocation7 + $0x64] sm:$0xf]
        %v1830 = vld [vmem:[#allocation7 + $0x68] sm:$0xf]
        %v1831 = vld [vmem:[#allocation7 + $0x6c] sm:$0xf]
        %v1832 = vld [vmem:[#allocation7 + $0x70] sm:$0xf]
        %v1833 = vld [vmem:[#allocation7 + $0x74] sm:$0xf]
        %v1834 = vld [vmem:[#allocation7 + $0x78] sm:$0xf]
        %v1835 = vld [vmem:[#allocation7 + $0x7c] sm:$0xf]
        %v1836 = vld [vmem:[%s16] sm:$0x1]
        %v1838 = vperm.slane %v1836, 0
        %v1872 = vunpack.c.l.b16 %v1804
        %v1873 = vunpack.c.l.b16 %v1805
        %v1874 = vunpack.c.l.b16 %v1806
        %v1875 = vunpack.c.l.b16 %v1807
        %v1876 = vunpack.c.l.b16 %v1808
        %v1877 = vunpack.c.l.b16 %v1809
        %v1878 = vunpack.c.l.b16 %v1810
        %v1879 = vunpack.c.l.b16 %v1811
        %v1880 = vunpack.c.l.b16 %v1812
        %v1881 = vunpack.c.l.b16 %v1813
        %v1882 = vunpack.c.l.b16 %v1814
        %v1883 = vunpack.c.l.b16 %v1815
        %v1884 = vunpack.c.l.b16 %v1816
        %v1885 = vunpack.c.l.b16 %v1817
        %v1886 = vunpack.c.l.b16 %v1818
        %v1887 = vunpack.c.l.b16 %v1819
        %v1888 = vunpack.c.l.b16 %v1820
        %v1889 = vunpack.c.l.b16 %v1821
        %v1890 = vunpack.c.l.b16 %v1822
        %v1891 = vunpack.c.l.b16 %v1823
        %v1892 = vunpack.c.l.b16 %v1824
        %v1893 = vunpack.c.l.b16 %v1825
        %v1894 = vunpack.c.l.b16 %v1826
        %v1895 = vunpack.c.l.b16 %v1827
        %v1896 = vunpack.c.l.b16 %v1828
        %v1897 = vunpack.c.l.b16 %v1829
        %v1898 = vunpack.c.l.b16 %v1830
        %v1899 = vunpack.c.l.b16 %v1831
        %v1900 = vunpack.c.l.b16 %v1832
        %v1901 = vunpack.c.l.b16 %v1833
        %v1902 = vunpack.c.l.b16 %v1834
        %v1903 = vunpack.c.l.b16 %v1835
        %v1904 = vpack.c.b16 %v1873, %v1872
        %v1905 = vpack.c.b16 %v1875, %v1874
        %v1906 = vpack.c.b16 %v1877, %v1876
        %v1907 = vpack.c.b16 %v1879, %v1878
        %v1908 = vpack.c.b16 %v1881, %v1880
        %v1909 = vpack.c.b16 %v1883, %v1882
        %v1910 = vpack.c.b16 %v1885, %v1884
        %v1911 = vpack.c.b16 %v1887, %v1886
        %v1912 = vpack.c.b16 %v1889, %v1888
        %v1913 = vpack.c.b16 %v1891, %v1890
        %v1914 = vpack.c.b16 %v1893, %v1892
        %v1915 = vpack.c.b16 %v1895, %v1894
        %v1916 = vpack.c.b16 %v1897, %v1896
        %v1917 = vpack.c.b16 %v1899, %v1898
        %v1918 = vpack.c.b16 %v1901, %v1900
        %v1919 = vpack.c.b16 %v1903, %v1902
        %1936 = vmatpush.bf16.msra.mxu0 %v1911
        %1937 = vmatpush.bf16.msra.mxu0 %v1910
        %1938 = vmatpush.bf16.msra.mxu0 %v1909
        %1939 = vmatpush.bf16.msra.mxu0 %v1908
        %1940 = vmatpush.bf16.msra.mxu0 %v1907
        %1941 = vmatpush.bf16.msra.mxu0 %v1906
        %1942 = vmatpush.bf16.msra.mxu0 %v1905
        %1943 = vmatpush.bf16.msra.mxu0 %v1904
        %1944 = vmatmul.bf16.gmra.mxu0 %v1802
        %v1945 = vpop.f32.mrf.mxu0
        %v1946 = vadd.f32 %v1838, %v1945
        %v1947 = vpop.f32.mrf.mxu0
        %1948 = vdwg.mxu0
        %1949 = vmatpush.bf16.msra.mxu0 %v1919
        %1950 = vmatpush.bf16.msra.mxu0 %v1918
        %1951 = vmatpush.bf16.msra.mxu0 %v1917
        %1952 = vmatpush.bf16.msra.mxu0 %v1916
        %1953 = vmatpush.bf16.msra.mxu0 %v1915
        %1954 = vmatpush.bf16.msra.mxu0 %v1914
        %1955 = vmatpush.bf16.msra.mxu0 %v1913
        %1956 = vmatpush.bf16.msra.mxu0 %v1912
        %1957 = vmatmul.bf16.gmra.mxu0 %v1803
        %v1958 = vpop.f32.mrf.mxu0
        %v1959 = vadd.f32 %v1946, %v1958
        %v1960 = vpop.f32.mrf.mxu0
        %1961 = vdwg.mxu0
        %v1962 = vrot.slane %v1959, 4
        %v1963 = vadd.f32 %v1959, %v1962
        %v1964 = vrot.slane %v1963, 2
        %v1965 = vadd.f32 %v1963, %v1964
        %v1966 = vrot.slane %v1965, 1
        %v1967 = vadd.f32 %v1965, %v1966
        %v1968 = vmul.f32 %v1967, %v1089
        %v1969 = vsub.f32 %v1959, %v1968
        %v1970 = vmul.f32 %v1969, %v1969
        %v1971 = vrot.slane %v1970, 4
        %v1972 = vadd.f32 %v1970, %v1971
        %v1973 = vrot.slane %v1972, 2
        %v1974 = vadd.f32 %v1972, %v1973
        %v1975 = vrot.slane %v1974, 1
        %v1976 = vadd.f32 %v1974, %v1975
        %v1977 = vmul.f32 %v1976, %v1089
        %v1978 = vadd.f32 %v1977, 1e-05
        %v1979 = vrsqrt.pop %v1978
        %v1980 = vmul.f32 %v1979, %v1978
        %v1981 = vmul.f32 %v1980, %v1979
        %v1982 = vmul.f32 0.5, %v1981
        %v1983 = vsub.f32 1.5, %v1982
        %v1984 = vmul.f32 %v1979, %v1983
        %vm1985 = vweird.f32 %v1978
        %vm1986 = vweird.f32 %v1979
        %vm1987 = vmor %vm1985, %vm1986
        %v1988 = vsel %vm1987, %v1979, %v1984
        %v1989 = vmul.f32 %v1969, %v1988
        %v1990 = vld [vmem:[%s17] sm:$0x1]
        %v1992 = vperm.slane %v1990, 0
        %v1994 = vmul.f32 %v1989, %v1992
        %v1995 = vld [vmem:[%s18] sm:$0x1]
        %v1997 = vperm.slane %v1995, 0
        %v1999 = vadd.f32 %v1994, %v1997
        %v2000 = vmax.f32 %v1999, 0.0
        %v2001 = vpack.c.bf16 %v2000, %v2000
        %v2002 = vld [vmem:[#allocation9] sm:$0xff]
        %v2003 = vld [vmem:[#allocation9 + $0x8] sm:$0xff]
        %v2004 = vld [vmem:[#allocation9 + $0x10] sm:$0xff]
        %v2005 = vld [vmem:[#allocation9 + $0x18] sm:$0xff]
        %v2006 = vld [vmem:[#allocation9 + $0x20] sm:$0xff]
        %v2007 = vld [vmem:[#allocation9 + $0x28] sm:$0xff]
        %v2008 = vld [vmem:[#allocation9 + $0x30] sm:$0xff]
        %v2009 = vld [vmem:[#allocation9 + $0x38] sm:$0xff]
        %v2010 = vld [vmem:[#allocation9 + $0x40] sm:$0xff]
        %v2011 = vld [vmem:[#allocation9 + $0x48] sm:$0xff]
        %v2012 = vld [vmem:[#allocation9 + $0x50] sm:$0xff]
        %v2013 = vld [vmem:[#allocation9 + $0x58] sm:$0xff]
        %v2014 = vld [vmem:[#allocation9 + $0x60] sm:$0xff]
        %v2015 = vld [vmem:[#allocation9 + $0x68] sm:$0xff]
        %v2016 = vld [vmem:[#allocation9 + $0x70] sm:$0xff]
        %v2017 = vld [vmem:[#allocation9 + $0x78] sm:$0xff]
        %v2018 = vld [vmem:[%s20] sm:$0x3]
        %v2020 = vperm.slane %v2018, 0
        %v2021 = vperm.slane %v2018, 1
        %v2040 = vunpack.c.l.b16 %v2002
        %v2041 = vunpack.c.h.b16 %v2002
        %v2042 = vunpack.c.l.b16 %v2003
        %v2043 = vunpack.c.h.b16 %v2003
        %v2044 = vunpack.c.l.b16 %v2004
        %v2045 = vunpack.c.h.b16 %v2004
        %v2046 = vunpack.c.l.b16 %v2005
        %v2047 = vunpack.c.h.b16 %v2005
        %v2048 = vunpack.c.l.b16 %v2006
        %v2049 = vunpack.c.h.b16 %v2006
        %v2050 = vunpack.c.l.b16 %v2007
        %v2051 = vunpack.c.h.b16 %v2007
        %v2052 = vunpack.c.l.b16 %v2008
        %v2053 = vunpack.c.h.b16 %v2008
        %v2054 = vunpack.c.l.b16 %v2009
        %v2055 = vunpack.c.h.b16 %v2009
        %v2056 = vunpack.c.l.b16 %v2010
        %v2057 = vunpack.c.h.b16 %v2010
        %v2058 = vunpack.c.l.b16 %v2011
        %v2059 = vunpack.c.h.b16 %v2011
        %v2060 = vunpack.c.l.b16 %v2012
        %v2061 = vunpack.c.h.b16 %v2012
        %v2062 = vunpack.c.l.b16 %v2013
        %v2063 = vunpack.c.h.b16 %v2013
        %v2064 = vunpack.c.l.b16 %v2014
        %v2065 = vunpack.c.h.b16 %v2014
        %v2066 = vunpack.c.l.b16 %v2015
        %v2067 = vunpack.c.h.b16 %v2015
        %v2068 = vunpack.c.l.b16 %v2016
        %v2069 = vunpack.c.h.b16 %v2016
        %v2070 = vunpack.c.l.b16 %v2017
        %v2071 = vunpack.c.h.b16 %v2017
        %v2072 = vpack.c.b16 %v2042, %v2040
        %v2073 = vpack.c.b16 %v2043, %v2041
        %v2074 = vpack.c.b16 %v2046, %v2044
        %v2075 = vpack.c.b16 %v2047, %v2045
        %v2076 = vpack.c.b16 %v2050, %v2048
        %v2077 = vpack.c.b16 %v2051, %v2049
        %v2078 = vpack.c.b16 %v2054, %v2052
        %v2079 = vpack.c.b16 %v2055, %v2053
        %v2080 = vpack.c.b16 %v2058, %v2056
        %v2081 = vpack.c.b16 %v2059, %v2057
        %v2082 = vpack.c.b16 %v2062, %v2060
        %v2083 = vpack.c.b16 %v2063, %v2061
        %v2084 = vpack.c.b16 %v2066, %v2064
        %v2085 = vpack.c.b16 %v2067, %v2065
        %v2086 = vpack.c.b16 %v2070, %v2068
        %v2087 = vpack.c.b16 %v2071, %v2069
        %2104 = vmatpush.bf16.msra.mxu0 %v2086
        %2105 = vmatpush.bf16.msra.mxu0 %v2084
        %2106 = vmatpush.bf16.msra.mxu0 %v2082
        %2107 = vmatpush.bf16.msra.mxu0 %v2080
        %2108 = vmatpush.bf16.msra.mxu0 %v2078
        %2109 = vmatpush.bf16.msra.mxu0 %v2076
        %2110 = vmatpush.bf16.msra.mxu0 %v2074
        %2111 = vmatpush.bf16.msra.mxu0 %v2072
        %2112 = vmatmul.bf16.gmra.mxu0 %v2001
        %v2113 = vpop.f32.mrf.mxu0
        %v2114 = vadd.f32 %v2020, %v2113
        %v2115 = vpop.f32.mrf.mxu0
        %2116 = vdwg.mxu0
        %2117 = vmatpush.bf16.msra.mxu0 %v2087
        %2118 = vmatpush.bf16.msra.mxu0 %v2085
        %2119 = vmatpush.bf16.msra.mxu0 %v2083
        %2120 = vmatpush.bf16.msra.mxu0 %v2081
        %2121 = vmatpush.bf16.msra.mxu0 %v2079
        %2122 = vmatpush.bf16.msra.mxu0 %v2077
        %2123 = vmatpush.bf16.msra.mxu0 %v2075
        %2124 = vmatpush.bf16.msra.mxu0 %v2073
        %2125 = vmatmul.bf16.gmra.mxu0 %v2001
        %v2126 = vpop.f32.mrf.mxu0
        %v2127 = vadd.f32 %v2021, %v2126
        %v2128 = vpop.f32.mrf.mxu0
        %2129 = vdwg.mxu0
        %2130 = vst [vmem:[%s774] sm:$0xff] %v1800
        %2131 = vst [vmem:[%s774 + $0x8] sm:$0xff] %v1801
        %2132 = vst [vmem:[%s779] sm:$0xff] %v2114
        %2133 = vst [vmem:[%s779 + $0x8] sm:$0xff] %v2127
        %p2134 = scmp.lt.s32.totalorder %s37, 1
        %s2135 = scalar_select %p2134, %s37, 1
        %s2136 = smul.addr %s2135, 2
        %s2137 = smul.addr %s2136, 8
        %s2138 = scalar_lea.vmem %s21, %s2137
        %p2139 = scmp.lt.s32.totalorder %s37, 1
        %s2140 = scalar_select %p2139, %s37, 1
        %s2141 = smul.addr %s2140, 2
        %s2142 = smul.addr %s2141, 8
        %s2143 = scalar_lea.vmem %s22, %s2142
        // Predicated region
        $region125: #{simsiam_forward.2} parent=103 // pred_check
          %p2144 = pneg %p501
        $region126: #{simsiam_forward.2} parent=103 // pred_check_branch
          %2146 = sbr.rel (%p2144) target = $region128
        $region127: #{simsiam_forward.2} parent=103 // pred_region
          _
        $region128: #{simsiam_forward.2} parent=103 // pred_fallthru
          _
        // Predicated region
        $region129: #{simsiam_forward.2} parent=103 // pred_check
          %p2147 = pneg %p527
        $region130: #{simsiam_forward.2} parent=103 // pred_check_branch
          %2149 = sbr.rel (%p2147) target = $region132
        $region131: #{simsiam_forward.2} parent=103 // pred_region
          _
        $region132: #{simsiam_forward.2} parent=103 // pred_fallthru
          _
      $region104: #{simsiam_forward.2} parent=5 // pred_fallthru
        _
      %p2150 = scmp.le.s32.totalorder 2, %s32
      // Predicated region
      $region133: #{simsiam_forward.2} parent=5 // pred_check
        %p2151 = pneg %p2150
      $region134: #{simsiam_forward.2} parent=5 // pred_check_branch
        %2153 = sbr.rel (%p2151) target = $region136
      $region135: #{simsiam_forward.2} parent=5 // pred_region
        %s2154 = ssub.s32 %s32, 2
        // Predicated region
        $region137: #{simsiam_forward.2} parent=135 // pred_check
          %p2155 = pneg %p507
        $region138: #{simsiam_forward.2} parent=135 // pred_check_branch
          %2157 = sbr.rel (%p2155) target = $region140
        $region139: #{simsiam_forward.2} parent=135 // pred_region
          %p2158 = scmp.lt.s32.totalorder %s38, 1
          %s2159 = scalar_select %p2158, %s38, 1
          %s2160 = smul.addr %s2159, 2
          %s2161 = smul.addr %s2160, 8
          %s2162 = scalar_lea.vmem %s21, %s2161
        $region140: #{simsiam_forward.2} parent=135 // pred_fallthru
          _
        // Predicated region
        $region141: #{simsiam_forward.2} parent=135 // pred_check
          %p2163 = pneg %p533
        $region142: #{simsiam_forward.2} parent=135 // pred_check_branch
          %2165 = sbr.rel (%p2163) target = $region144
        $region143: #{simsiam_forward.2} parent=135 // pred_region
          %p2166 = scmp.lt.s32.totalorder %s38, 1
          %s2167 = scalar_select %p2166, %s38, 1
          %s2168 = smul.addr %s2167, 2
          %s2169 = smul.addr %s2168, 8
          %s2170 = scalar_lea.vmem %s22, %s2169
        $region144: #{simsiam_forward.2} parent=135 // pred_fallthru
          _
      $region136: #{simsiam_forward.2} parent=5 // pred_fallthru
        _
    $region6: #{simsiam_forward.2} parent=1 // loop_footer
      %s36 = sadd.s32 1, %s32
    $region7: #{simsiam_forward.2} parent=1 // loop_footer_branch
      %31 = sbr.rel target = $region3
    $region8: #{simsiam_forward.2} parent=1 // loop_exit
      _
    %2171 = vsyncpa [#allocation3], 1
    %s2172 = scalar_lea.sflag [#allocation3], 1
    %2173 = vsyncpa %s2172, 1
    %2174 = vsyncpa [#allocation5], 1
    %2175 = vsyncpa [#allocation8], 1

</llo_original>
